<compile_context>
chip_gen: v7x
topology: tpu7x:2x2x1
jax: 0.10.0
libtpu: 0.0.40
codegen_flags: <defaults>
</compile_context>

<pallas_src>
import functools

import jax
import jax.numpy as jnp
import numpy as np
from jax import lax
from jax.experimental import pallas as pl
from jax.experimental.pallas import tpu as pltpu

NEG_SLOPE = 0.2  # nn.LeakyReLU(negative_slope=0.2)


def _lrelu(v):
    return jnp.where(v > 0, v, NEG_SLOPE * v)


def _round_up(v, m):
    return -(-v // m) * m


# ---------------------------------------------------------------------------
# host-side constant operators
# ---------------------------------------------------------------------------
def _tap_masks_np(h, w):
    """mask[t, y*w+x] = 1 iff 3x3 tap t=(dy,dx) reads inside the image."""
    m = np.zeros((9, h * w), np.float32)
    for dy in range(3):
        for dx in range(3):
            t, oy, ox = dy * 3 + dx, dy - 1, dx - 1
            for y in range(h):
                for x in range(w):
                    if 0 <= y + oy < h and 0 <= x + ox < w:
                        m[t, y * w + x] = 1.0
    return m


def _pool_op_np(h, w, ho, wo):
    """(h*w, ho*wo) operator for AvgPool2d(4,2,1, count_include_pad=True).
    Entries are k/16 -> exactly representable in bf16."""
    m = np.zeros((h * w, ho * wo), np.float32)
    for i in range(ho):
        for j in range(wo):
            col = i * wo + j
            for a in range(4):
                for b in range(4):
                    y, x = 2 * i - 1 + a, 2 * j - 1 + b
                    if 0 <= y < h and 0 <= x < w:
                        m[y * w + x, col] += 1.0 / 16.0
    return m


# ---------------------------------------------------------------------------
# kernel (one image per grid step)
# ---------------------------------------------------------------------------
def _resblock_down_kernel(x_ref, w1_ref, b1_ref, w2_ref, b2_ref, ws_ref,
                          bs_ref, mk_ref, mkp_ref, pp_ref, out_ref,
                          apad_ref, apadp_ref, ima_ref, imp_ref, pin_ref,
                          *, cin, cin_pad, cout, h, w, ho, wo, pad, pad_p,
                          mxu_dtype):
    hw, howo = h * w, ho * wo
    offs = [(dy - 1) * w + (dx - 1) for dy in range(3) for dx in range(3)]
    offs_p = [(dy - 1) * wo + (dx - 1) for dy in range(3) for dx in range(3)]

    # Zero the halo strips of the staging buffers (never written by data) and
    # the K-padding rows of the im2col buffers, so masked taps / zero weight
    # columns never meet uninitialized VMEM (avoids 0 * NaN).
    apad_ref[:, 0:pad] = jnp.zeros((cin, pad), jnp.float32)
    apad_ref[:, pad + hw:2 * pad + hw] = jnp.zeros((cin, pad), jnp.float32)
    apadp_ref[:, 0:pad_p] = jnp.zeros((cin, pad_p), jnp.float32)
    apadp_ref[:, pad_p + howo:2 * pad_p + howo] = jnp.zeros((cin, pad_p),
                                                            jnp.float32)
    if cin_pad != cin:
        for t in range(9):
            ima_ref[t * cin_pad + cin:(t + 1) * cin_pad, :] = jnp.zeros(
                (cin_pad - cin, hw), mxu_dtype)
            imp_ref[t * cin_pad + cin:(t + 1) * cin_pad, :] = jnp.zeros(
                (cin_pad - cin, howo), mxu_dtype)

    w1 = w1_ref[...]
    b1 = b1_ref[...]
    w2 = w2_ref[...]
    b2 = b2_ref[...]
    wsm = ws_ref[...]
    bsm = bs_ref[...]

    def im2col(a, apad, im, mk, padv, offv, ncols):
        # a: (cin, ncols) activation (flattened row-major spatial on lanes).
        # Stage once with a lane-aligned store, read the 9 tap-shifted windows
        # as plain offset loads, mask out-of-image taps and stack on the
        # K (sublane) axis so each 3x3 conv is ONE K = 9*cin_pad MXU dot.
        # Mask math in f32 (v5e VPU has no bf16); cast at the MXU boundary.
        apad[:, padv:padv + ncols] = a.astype(jnp.float32)
        for t in range(9):
            shifted = apad[:, padv + offv[t]:padv + offv[t] + ncols]
            im[t * cin_pad:t * cin_pad + cin, :] = (
                shifted * mk[t:t + 1, :]).astype(mxu_dtype)
        return im[...]

    xf = x_ref[0]                                                    # (cin, hw)

    # main path: conv3x3 -> LReLU -> conv3x3   (pooling fused below)
    # NOTE: conv2's im2col depends on conv1's output, so ping-ponging the
    # full-res im2col buffer would not expose extra overlap; the pooled-res
    # im2col uses a separate buffer.
    y1 = _lrelu(jnp.dot(w1,
                        im2col(xf, apad_ref, ima_ref, mk_ref, pad, offs, hw),
                        preferred_element_type=jnp.float32) + b1)    # (cin, hw)
    y2 = jnp.dot(w2, im2col(y1, apad_ref, ima_ref, mk_ref, pad, offs, hw),
                 preferred_element_type=jnp.float32) + b2            # (cout, hw)

    # AvgPool2d(4,2,1) for BOTH paths fused into one MXU dot (M = cout + cin)
    # against the host-precomputed pool operator.
    pin_ref[0:cout, :] = y2.astype(mxu_dtype)
    pin_ref[cout:cout + cin, :] = xf
    pooled = jnp.dot(pin_ref[...], pp_ref[...],
                     preferred_element_type=jnp.float32)          # (cout+cin, howo)
    main = _lrelu(pooled[0:cout, :])                              # (cout, howo)
    x_pool = pooled[cout:cout + cin, :]                           # (cin, howo)

    # shortcut: conv3x3 at pooled resolution (pool-first restructure; the old
    # (hw, 9*howo) fused operator is gone).
    short = jnp.dot(wsm,
                    im2col(x_pool, apadp_ref, imp_ref, mkp_ref, pad_p, offs_p,
                           howo),
                    preferred_element_type=jnp.float32) + bsm     # (cout, howo)

    out_ref[0] = (main + short).astype(out_ref.dtype)


# ---------------------------------------------------------------------------
# wrapper
# ---------------------------------------------------------------------------
def resblock_down(x_nchw, params, *, mxu_dtype=jnp.bfloat16):
    """Resblock(resample='down') forward.  NCHW in -> NCHW out (float32)."""
    n, cin, h, w = x_nchw.shape
    cout = params["w2"].shape[0]
    ho = (h + 2 - 4) // 2 + 1
    wo = (w + 2 - 4) // 2 + 1
    hw, howo = h * w, ho * wo

    sub = 8 * (4 // np.dtype(mxu_dtype).itemsize)   # sublane tile height
    cin_pad = _round_up(cin, sub)                   # per-tap K block rows
    pad = _round_up(w + 1, 128)                     # lane-aligned halo (full res)
    pad_p = _round_up(wo + 1, 128)                  # lane-aligned halo (pooled)

    # flattened NCHW: free reshape, no HBM transpose pass
    x = x_nchw.reshape(n, cin, hw).astype(mxu_dtype)

    def wmat(wt):
        # torch (cout, cin, 3, 3) -> (cout, 9*cin_pad), K rows t*cin_pad + c,
        # zero columns for the sublane-padding rows of the im2col buffers.
        co, ci = wt.shape[0], wt.shape[1]
        wr = jnp.transpose(wt, (0, 2, 3, 1)).reshape(co, 9, ci)
        wr = jnp.pad(wr, ((0, 0), (0, 0), (0, cin_pad - ci)))
        return wr.reshape(co, 9 * cin_pad).astype(mxu_dtype)

    w1m, w2m, wsm = wmat(params["w1"]), wmat(params["w2"]), wmat(params["ws"])
    b1 = params["b1"].reshape(-1, 1).astype(jnp.float32)
    b2 = params["b2"].reshape(-1, 1).astype(jnp.float32)
    bs = params["bs"].reshape(-1, 1).astype(jnp.float32)

    masks = jnp.asarray(_tap_masks_np(h, w))               # f32 (VPU math)
    masks_p = jnp.asarray(_tap_masks_np(ho, wo))
    pool_op = jnp.asarray(_pool_op_np(h, w, ho, wo)).astype(mxu_dtype)

    kernel = functools.partial(
        _resblock_down_kernel, cin=cin, cin_pad=cin_pad, cout=cout,
        h=h, w=w, ho=ho, wo=wo, pad=pad, pad_p=pad_p, mxu_dtype=mxu_dtype)

    out = pl.pallas_call(
        kernel,
        out_shape=jax.ShapeDtypeStruct((n, cout, howo), jnp.float32),
        grid_spec=pltpu.PrefetchScalarGridSpec(
            num_scalar_prefetch=0,
            grid=(n,),                       # one image / step; >=2 steps for v7x
            in_specs=[
                pl.BlockSpec((1, cin, hw), lambda g: (g, 0, 0)),      # x
                pl.BlockSpec((cin, 9 * cin_pad), lambda g: (0, 0)),   # w1
                pl.BlockSpec((cin, 1), lambda g: (0, 0)),             # b1
                pl.BlockSpec((cout, 9 * cin_pad), lambda g: (0, 0)),  # w2
                pl.BlockSpec((cout, 1), lambda g: (0, 0)),            # b2
                pl.BlockSpec((cout, 9 * cin_pad), lambda g: (0, 0)),  # ws
                pl.BlockSpec((cout, 1), lambda g: (0, 0)),            # bs
                pl.BlockSpec((9, hw), lambda g: (0, 0)),              # tap masks
                pl.BlockSpec((9, howo), lambda g: (0, 0)),            # pooled masks
                pl.BlockSpec((hw, howo), lambda g: (0, 0)),           # pool operator
            ],
            out_specs=pl.BlockSpec((1, cout, howo), lambda g: (g, 0, 0)),
            scratch_shapes=[
                pltpu.VMEM((cin, 2 * pad + hw), jnp.float32),       # halo staging
                pltpu.VMEM((cin, 2 * pad_p + howo), jnp.float32),   # halo staging (pooled)
                pltpu.VMEM((9 * cin_pad, hw), mxu_dtype),           # im2col (full res)
                pltpu.VMEM((9 * cin_pad, howo), mxu_dtype),         # im2col (pooled)
                pltpu.VMEM((cout + cin, hw), mxu_dtype),            # fused pooling LHS
            ],
        ),
        compiler_params=pltpu.CompilerParams(
            dimension_semantics=("parallel",),
            vmem_limit_bytes=32 * 1024 * 1024),
    )(x, w1m, b1, w2m, b2, wsm, bs, masks, masks_p, pool_op)

    return out.reshape(n, cout, ho, wo)


# ---------------------------------------------------------------------------
# pure-JAX reference (matches PyTorch semantics) + test
# ---------------------------------------------------------------------------
def resblock_down_ref(x_nchw, params):
    x = jnp.transpose(x_nchw, (0, 2, 3, 1)).astype(jnp.float32)

    def hwio(wt):
        return jnp.transpose(wt, (2, 3, 1, 0))

    def conv(v, wt, b):
        return lax.conv_general_dilated(
            v, hwio(wt), window_strides=(1, 1), padding=((1, 1), (1, 1)),
            dimension_numbers=("NHWC", "HWIO", "NHWC")) + b

    def pool(v):
        s = lax.reduce_window(v, 0.0, lax.add, (1, 4, 4, 1), (1, 2, 2, 1),
                              ((0, 0), (1, 1), (1, 1), (0, 0)))
        return s / 16.0

    main = _lrelu(conv(x, params["w1"], params["b1"]))
    main = conv(main, params["w2"], params["b2"])
    main = _lrelu(pool(main))
    short = conv(pool(x), params["ws"], params["bs"])
    return jnp.transpose(main + short, (0, 3, 1, 2))


def init_params(key, in_dim, out_dim):
    """Deterministic synthetic parameters (PyTorch Conv2d layouts)."""
    ks = jax.random.split(key, 6)

    def conv_w(k, cin, cout):
        return jax.random.normal(k, (cout, cin, 3, 3), jnp.float32) * 0.1

    return dict(
        w1=conv_w(ks[0], in_dim, in_dim),
        b1=jax.random.normal(ks[1], (in_dim,), jnp.float32) * 0.05,
        w2=conv_w(ks[2], in_dim, out_dim),
        b2=jax.random.normal(ks[3], (out_dim,), jnp.float32) * 0.05,
        ws=conv_w(ks[4], in_dim, out_dim),
        bs=jax.random.normal(ks[5], (out_dim,), jnp.float32) * 0.05,
    )


if __name__ == "__main__":
    key = jax.random.PRNGKey(0)
    kx, kp = jax.random.split(key)

    N, Cin, Cout, H, W = 2, 4, 8, 16, 16
    x = jax.random.normal(kx, (N, Cin, H, W), jnp.float32)
    params = init_params(kp, Cin, Cout)

    ref = resblock_down_ref(x, params)

    # bf16 MXU fast path (f32 accumulation): relaxed tolerance.
    out = jax.block_until_ready(resblock_down(x, params))
    assert out.shape == (N, Cout, H // 2, W // 2)
    np.testing.assert_allclose(np.asarray(out), np.asarray(ref),
                               rtol=5e-2, atol=5e-2)

    # f32 mode: exact-semantics validation against the reference.
    out_f32 = jax.block_until_ready(
        resblock_down(x, params, mxu_dtype=jnp.float32))
    np.testing.assert_allclose(np.asarray(out_f32), np.asarray(ref),
                               rtol=1e-4, atol=1e-4)

    print("KERNEL_OK")
</pallas_src>

<mosaic_0001>
module attributes {stable_mosaic.version = 11 : i64} {
  func.func @_resblock_down_kernel(%arg0: i32, %arg1: memref<1x4x256xbf16, #tpu.memory_space<vmem>>, %arg2: memref<4x144xbf16, #tpu.memory_space<vmem>>, %arg3: memref<4x1xf32, #tpu.memory_space<vmem>>, %arg4: memref<8x144xbf16, #tpu.memory_space<vmem>>, %arg5: memref<8x1xf32, #tpu.memory_space<vmem>>, %arg6: memref<8x144xbf16, #tpu.memory_space<vmem>>, %arg7: memref<8x1xf32, #tpu.memory_space<vmem>>, %arg8: memref<9x256xf32, #tpu.memory_space<vmem>>, %arg9: memref<9x64xf32, #tpu.memory_space<vmem>>, %arg10: memref<256x64xbf16, #tpu.memory_space<vmem>>, %arg11: memref<1x8x64xf32, #tpu.memory_space<vmem>>, %arg12: memref<4x512xf32, #tpu.memory_space<vmem>>, %arg13: memref<4x320xf32, #tpu.memory_space<vmem>>, %arg14: memref<144x256xbf16, #tpu.memory_space<vmem>>, %arg15: memref<144x64xbf16, #tpu.memory_space<vmem>>, %arg16: memref<12x256xbf16, #tpu.memory_space<vmem>>) attributes {dimension_semantics = [#tpu.dimension_semantics<parallel>], iteration_bounds = array<i64: 2>, scalar_prefetch = 0 : i64, scratch_operands = 5 : i64, tpu.core_type = #tpu.core_type<tc>, window_params = [{transform_indices = @transform_0, window_bounds = array<i64: 1, 4, 256>}, {pipeline_mode = #tpu.pipeline_mode<synchronous>, transform_indices = @transform_1, window_bounds = array<i64: 4, 144>}, {pipeline_mode = #tpu.pipeline_mode<synchronous>, transform_indices = @transform_2, window_bounds = array<i64: 4, 1>}, {pipeline_mode = #tpu.pipeline_mode<synchronous>, transform_indices = @transform_3, window_bounds = array<i64: 8, 144>}, {pipeline_mode = #tpu.pipeline_mode<synchronous>, transform_indices = @transform_4, window_bounds = array<i64: 8, 1>}, {pipeline_mode = #tpu.pipeline_mode<synchronous>, transform_indices = @transform_5, window_bounds = array<i64: 8, 144>}, {pipeline_mode = #tpu.pipeline_mode<synchronous>, transform_indices = @transform_6, window_bounds = array<i64: 8, 1>}, {pipeline_mode = #tpu.pipeline_mode<synchronous>, transform_indices = @transform_7, window_bounds = array<i64: 9, 256>}, {pipeline_mode = #tpu.pipeline_mode<synchronous>, transform_indices = @transform_8, window_bounds = array<i64: 9, 64>}, {pipeline_mode = #tpu.pipeline_mode<synchronous>, transform_indices = @transform_9, window_bounds = array<i64: 256, 64>}, {transform_indices = @transform_10, window_bounds = array<i64: 1, 8, 64>}]} {
    %cst = arith.constant 0.000000e+00 : f32
    %0 = vector.broadcast %cst : f32 to vector<4x128xf32>
    %c0 = arith.constant 0 : index
    %c0_0 = arith.constant 0 : index
    %1 = vector.load %arg12[%c0, %c0_0] : memref<4x512xf32, #tpu.memory_space<vmem>>, vector<4x128xf32>
    tpu.vector_store %arg12[%c0, %c0_0], %0 {strides = array<i32>} : memref<4x512xf32, #tpu.memory_space<vmem>>, vector<4x128xf32>,
    %cst_1 = arith.constant 0.000000e+00 : f32
    %2 = vector.broadcast %cst_1 : f32 to vector<4x128xf32>
    %c0_2 = arith.constant 0 : index
    %c384 = arith.constant 384 : index
    %3 = vector.load %arg12[%c0_2, %c384] : memref<4x512xf32, #tpu.memory_space<vmem>>, vector<4x128xf32>
    tpu.vector_store %arg12[%c0_2, %c384], %2 {strides = array<i32>} : memref<4x512xf32, #tpu.memory_space<vmem>>, vector<4x128xf32>,
    %cst_3 = arith.constant 0.000000e+00 : f32
    %4 = vector.broadcast %cst_3 : f32 to vector<4x128xf32>
    %c0_4 = arith.constant 0 : index
    %c0_5 = arith.constant 0 : index
    %5 = vector.load %arg13[%c0_4, %c0_5] : memref<4x320xf32, #tpu.memory_space<vmem>>, vector<4x128xf32>
    tpu.vector_store %arg13[%c0_4, %c0_5], %4 {strides = array<i32>} : memref<4x320xf32, #tpu.memory_space<vmem>>, vector<4x128xf32>,
    %cst_6 = arith.constant 0.000000e+00 : f32
    %6 = vector.broadcast %cst_6 : f32 to vector<4x128xf32>
    %c0_7 = arith.constant 0 : index
    %c192 = arith.constant 192 : index
    %7 = vector.load %arg13[%c0_7, %c192] : memref<4x320xf32, #tpu.memory_space<vmem>>, vector<4x128xf32>
    tpu.vector_store %arg13[%c0_7, %c192], %6 {strides = array<i32>} : memref<4x320xf32, #tpu.memory_space<vmem>>, vector<4x128xf32>,
    %cst_8 = arith.constant 0.000000e+00 : bf16
    %8 = vector.broadcast %cst_8 : bf16 to vector<12x256xbf16>
    %c4 = arith.constant 4 : index
    %c0_9 = arith.constant 0 : index
    %9 = vector.load %arg14[%c4, %c0_9] : memref<144x256xbf16, #tpu.memory_space<vmem>>, vector<12x256xbf16>
    tpu.vector_store %arg14[%c4, %c0_9], %8 {strides = array<i32>} : memref<144x256xbf16, #tpu.memory_space<vmem>>, vector<12x256xbf16>,
    %cst_10 = arith.constant 0.000000e+00 : bf16
    %10 = vector.broadcast %cst_10 : bf16 to vector<12x64xbf16>
    %c4_11 = arith.constant 4 : index
    %c0_12 = arith.constant 0 : index
    %11 = vector.load %arg15[%c4_11, %c0_12] : memref<144x64xbf16, #tpu.memory_space<vmem>>, vector<12x64xbf16>
    tpu.vector_store %arg15[%c4_11, %c0_12], %10 {strides = array<i32>} : memref<144x64xbf16, #tpu.memory_space<vmem>>, vector<12x64xbf16>,
    %cst_13 = arith.constant 0.000000e+00 : bf16
    %12 = vector.broadcast %cst_13 : bf16 to vector<12x256xbf16>
    %c20 = arith.constant 20 : index
    %c0_14 = arith.constant 0 : index
    %13 = vector.load %arg14[%c20, %c0_14] : memref<144x256xbf16, #tpu.memory_space<vmem>>, vector<12x256xbf16>
    tpu.vector_store %arg14[%c20, %c0_14], %12 {strides = array<i32>} : memref<144x256xbf16, #tpu.memory_space<vmem>>, vector<12x256xbf16>,
    %cst_15 = arith.constant 0.000000e+00 : bf16
    %14 = vector.broadcast %cst_15 : bf16 to vector<12x64xbf16>
    %c20_16 = arith.constant 20 : index
    %c0_17 = arith.constant 0 : index
    %15 = vector.load %arg15[%c20_16, %c0_17] : memref<144x64xbf16, #tpu.memory_space<vmem>>, vector<12x64xbf16>
    tpu.vector_store %arg15[%c20_16, %c0_17], %14 {strides = array<i32>} : memref<144x64xbf16, #tpu.memory_space<vmem>>, vector<12x64xbf16>,
    %cst_18 = arith.constant 0.000000e+00 : bf16
    %16 = vector.broadcast %cst_18 : bf16 to vector<12x256xbf16>
    %c36 = arith.constant 36 : index
    %c0_19 = arith.constant 0 : index
    %17 = vector.load %arg14[%c36, %c0_19] : memref<144x256xbf16, #tpu.memory_space<vmem>>, vector<12x256xbf16>
    tpu.vector_store %arg14[%c36, %c0_19], %16 {strides = array<i32>} : memref<144x256xbf16, #tpu.memory_space<vmem>>, vector<12x256xbf16>,
    %cst_20 = arith.constant 0.000000e+00 : bf16
    %18 = vector.broadcast %cst_20 : bf16 to vector<12x64xbf16>
    %c36_21 = arith.constant 36 : index
    %c0_22 = arith.constant 0 : index
    %19 = vector.load %arg15[%c36_21, %c0_22] : memref<144x64xbf16, #tpu.memory_space<vmem>>, vector<12x64xbf16>
    tpu.vector_store %arg15[%c36_21, %c0_22], %18 {strides = array<i32>} : memref<144x64xbf16, #tpu.memory_space<vmem>>, vector<12x64xbf16>,
    %cst_23 = arith.constant 0.000000e+00 : bf16
    %20 = vector.broadcast %cst_23 : bf16 to vector<12x256xbf16>
    %c52 = arith.constant 52 : index
    %c0_24 = arith.constant 0 : index
    %21 = vector.load %arg14[%c52, %c0_24] : memref<144x256xbf16, #tpu.memory_space<vmem>>, vector<12x256xbf16>
    tpu.vector_store %arg14[%c52, %c0_24], %20 {strides = array<i32>} : memref<144x256xbf16, #tpu.memory_space<vmem>>, vector<12x256xbf16>,
    %cst_25 = arith.constant 0.000000e+00 : bf16
    %22 = vector.broadcast %cst_25 : bf16 to vector<12x64xbf16>
    %c52_26 = arith.constant 52 : index
    %c0_27 = arith.constant 0 : index
    %23 = vector.load %arg15[%c52_26, %c0_27] : memref<144x64xbf16, #tpu.memory_space<vmem>>, vector<12x64xbf16>
    tpu.vector_store %arg15[%c52_26, %c0_27], %22 {strides = array<i32>} : memref<144x64xbf16, #tpu.memory_space<vmem>>, vector<12x64xbf16>,
    %cst_28 = arith.constant 0.000000e+00 : bf16
    %24 = vector.broadcast %cst_28 : bf16 to vector<12x256xbf16>
    %c68 = arith.constant 68 : index
    %c0_29 = arith.constant 0 : index
    %25 = vector.load %arg14[%c68, %c0_29] : memref<144x256xbf16, #tpu.memory_space<vmem>>, vector<12x256xbf16>
    tpu.vector_store %arg14[%c68, %c0_29], %24 {strides = array<i32>} : memref<144x256xbf16, #tpu.memory_space<vmem>>, vector<12x256xbf16>,
    %cst_30 = arith.constant 0.000000e+00 : bf16
    %26 = vector.broadcast %cst_30 : bf16 to vector<12x64xbf16>
    %c68_31 = arith.constant 68 : index
    %c0_32 = arith.constant 0 : index
    %27 = vector.load %arg15[%c68_31, %c0_32] : memref<144x64xbf16, #tpu.memory_space<vmem>>, vector<12x64xbf16>
    tpu.vector_store %arg15[%c68_31, %c0_32], %26 {strides = array<i32>} : memref<144x64xbf16, #tpu.memory_space<vmem>>, vector<12x64xbf16>,
    %cst_33 = arith.constant 0.000000e+00 : bf16
    %28 = vector.broadcast %cst_33 : bf16 to vector<12x256xbf16>
    %c84 = arith.constant 84 : index
    %c0_34 = arith.constant 0 : index
    %29 = vector.load %arg14[%c84, %c0_34] : memref<144x256xbf16, #tpu.memory_space<vmem>>, vector<12x256xbf16>
    tpu.vector_store %arg14[%c84, %c0_34], %28 {strides = array<i32>} : memref<144x256xbf16, #tpu.memory_space<vmem>>, vector<12x256xbf16>,
    %cst_35 = arith.constant 0.000000e+00 : bf16
    %30 = vector.broadcast %cst_35 : bf16 to vector<12x64xbf16>
    %c84_36 = arith.constant 84 : index
    %c0_37 = arith.constant 0 : index
    %31 = vector.load %arg15[%c84_36, %c0_37] : memref<144x64xbf16, #tpu.memory_space<vmem>>, vector<12x64xbf16>
    tpu.vector_store %arg15[%c84_36, %c0_37], %30 {strides = array<i32>} : memref<144x64xbf16, #tpu.memory_space<vmem>>, vector<12x64xbf16>,
    %cst_38 = arith.constant 0.000000e+00 : bf16
    %32 = vector.broadcast %cst_38 : bf16 to vector<12x256xbf16>
    %c100 = arith.constant 100 : index
    %c0_39 = arith.constant 0 : index
    %33 = vector.load %arg14[%c100, %c0_39] : memref<144x256xbf16, #tpu.memory_space<vmem>>, vector<12x256xbf16>
    tpu.vector_store %arg14[%c100, %c0_39], %32 {strides = array<i32>} : memref<144x256xbf16, #tpu.memory_space<vmem>>, vector<12x256xbf16>,
    %cst_40 = arith.constant 0.000000e+00 : bf16
    %34 = vector.broadcast %cst_40 : bf16 to vector<12x64xbf16>
    %c100_41 = arith.constant 100 : index
    %c0_42 = arith.constant 0 : index
    %35 = vector.load %arg15[%c100_41, %c0_42] : memref<144x64xbf16, #tpu.memory_space<vmem>>, vector<12x64xbf16>
    tpu.vector_store %arg15[%c100_41, %c0_42], %34 {strides = array<i32>} : memref<144x64xbf16, #tpu.memory_space<vmem>>, vector<12x64xbf16>,
    %cst_43 = arith.constant 0.000000e+00 : bf16
    %36 = vector.broadcast %cst_43 : bf16 to vector<12x256xbf16>
    %c116 = arith.constant 116 : index
    %c0_44 = arith.constant 0 : index
    %37 = vector.load %arg14[%c116, %c0_44] : memref<144x256xbf16, #tpu.memory_space<vmem>>, vector<12x256xbf16>
    tpu.vector_store %arg14[%c116, %c0_44], %36 {strides = array<i32>} : memref<144x256xbf16, #tpu.memory_space<vmem>>, vector<12x256xbf16>,
    %cst_45 = arith.constant 0.000000e+00 : bf16
    %38 = vector.broadcast %cst_45 : bf16 to vector<12x64xbf16>
    %c116_46 = arith.constant 116 : index
    %c0_47 = arith.constant 0 : index
    %39 = vector.load %arg15[%c116_46, %c0_47] : memref<144x64xbf16, #tpu.memory_space<vmem>>, vector<12x64xbf16>
    tpu.vector_store %arg15[%c116_46, %c0_47], %38 {strides = array<i32>} : memref<144x64xbf16, #tpu.memory_space<vmem>>, vector<12x64xbf16>,
    %cst_48 = arith.constant 0.000000e+00 : bf16
    %40 = vector.broadcast %cst_48 : bf16 to vector<12x256xbf16>
    %c132 = arith.constant 132 : index
    %c0_49 = arith.constant 0 : index
    %41 = vector.load %arg14[%c132, %c0_49] : memref<144x256xbf16, #tpu.memory_space<vmem>>, vector<12x256xbf16>
    tpu.vector_store %arg14[%c132, %c0_49], %40 {strides = array<i32>} : memref<144x256xbf16, #tpu.memory_space<vmem>>, vector<12x256xbf16>,
    %cst_50 = arith.constant 0.000000e+00 : bf16
    %42 = vector.broadcast %cst_50 : bf16 to vector<12x64xbf16>
    %c132_51 = arith.constant 132 : index
    %c0_52 = arith.constant 0 : index
    %43 = vector.load %arg15[%c132_51, %c0_52] : memref<144x64xbf16, #tpu.memory_space<vmem>>, vector<12x64xbf16>
    tpu.vector_store %arg15[%c132_51, %c0_52], %42 {strides = array<i32>} : memref<144x64xbf16, #tpu.memory_space<vmem>>, vector<12x64xbf16>,
    %c0_53 = arith.constant 0 : index
    %c0_54 = arith.constant 0 : index
    %44 = vector.load %arg2[%c0_53, %c0_54] : memref<4x144xbf16, #tpu.memory_space<vmem>>, vector<4x144xbf16>
    %c0_55 = arith.constant 0 : index
    %c0_56 = arith.constant 0 : index
    %45 = vector.load %arg3[%c0_55, %c0_56] : memref<4x1xf32, #tpu.memory_space<vmem>>, vector<4x1xf32>
    %c0_57 = arith.constant 0 : index
    %c0_58 = arith.constant 0 : index
    %46 = vector.load %arg4[%c0_57, %c0_58] : memref<8x144xbf16, #tpu.memory_space<vmem>>, vector<8x144xbf16>
    %c0_59 = arith.constant 0 : index
    %c0_60 = arith.constant 0 : index
    %47 = vector.load %arg5[%c0_59, %c0_60] : memref<8x1xf32, #tpu.memory_space<vmem>>, vector<8x1xf32>
    %c0_61 = arith.constant 0 : index
    %c0_62 = arith.constant 0 : index
    %48 = vector.load %arg6[%c0_61, %c0_62] : memref<8x144xbf16, #tpu.memory_space<vmem>>, vector<8x144xbf16>
    %c0_63 = arith.constant 0 : index
    %c0_64 = arith.constant 0 : index
    %49 = vector.load %arg7[%c0_63, %c0_64] : memref<8x1xf32, #tpu.memory_space<vmem>>, vector<8x1xf32>
    %c0_65 = arith.constant 0 : index
    %c0_66 = arith.constant 0 : index
    %c0_67 = arith.constant 0 : index
    %50 = vector.load %arg1[%c0_65, %c0_66, %c0_67] : memref<1x4x256xbf16, #tpu.memory_space<vmem>>, vector<1x4x256xbf16>
    %51 = vector.shape_cast %50 : vector<1x4x256xbf16> to vector<4x256xbf16>
    %52 = arith.extf %51 : vector<4x256xbf16> to vector<4x256xf32>
    %c0_68 = arith.constant 0 : index
    %c128 = arith.constant 128 : index
    %53 = vector.load %arg12[%c0_68, %c128] : memref<4x512xf32, #tpu.memory_space<vmem>>, vector<4x256xf32>
    tpu.vector_store %arg12[%c0_68, %c128], %52 {strides = array<i32>} : memref<4x512xf32, #tpu.memory_space<vmem>>, vector<4x256xf32>,
    %c0_69 = arith.constant 0 : index
    %c111 = arith.constant 111 : index
    %54 = vector.load %arg12[%c0_69, %c111] : memref<4x512xf32, #tpu.memory_space<vmem>>, vector<4x256xf32>
    %c0_70 = arith.constant 0 : index
    %c0_71 = arith.constant 0 : index
    %55 = vector.load %arg8[%c0_70, %c0_71] : memref<9x256xf32, #tpu.memory_space<vmem>>, vector<1x256xf32>
    %56 = vector.broadcast %55 : vector<1x256xf32> to vector<4x256xf32>
    %57 = arith.mulf %54, %56 : vector<4x256xf32>
    %58 = arith.truncf %57 : vector<4x256xf32> to vector<4x256xbf16>
    %c0_72 = arith.constant 0 : index
    %c0_73 = arith.constant 0 : index
    %59 = vector.load %arg14[%c0_72, %c0_73] : memref<144x256xbf16, #tpu.memory_space<vmem>>, vector<4x256xbf16>
    tpu.vector_store %arg14[%c0_72, %c0_73], %58 {strides = array<i32>} : memref<144x256xbf16, #tpu.memory_space<vmem>>, vector<4x256xbf16>,
    %c0_74 = arith.constant 0 : index
    %c112 = arith.constant 112 : index
    %60 = vector.load %arg12[%c0_74, %c112] : memref<4x512xf32, #tpu.memory_space<vmem>>, vector<4x256xf32>
    %c1 = arith.constant 1 : index
    %c0_75 = arith.constant 0 : index
    %61 = vector.load %arg8[%c1, %c0_75] : memref<9x256xf32, #tpu.memory_space<vmem>>, vector<1x256xf32>
    %62 = vector.broadcast %61 : vector<1x256xf32> to vector<4x256xf32>
    %63 = arith.mulf %60, %62 : vector<4x256xf32>
    %64 = arith.truncf %63 : vector<4x256xf32> to vector<4x256xbf16>
    %c16 = arith.constant 16 : index
    %c0_76 = arith.constant 0 : index
    %65 = vector.load %arg14[%c16, %c0_76] : memref<144x256xbf16, #tpu.memory_space<vmem>>, vector<4x256xbf16>
    tpu.vector_store %arg14[%c16, %c0_76], %64 {strides = array<i32>} : memref<144x256xbf16, #tpu.memory_space<vmem>>, vector<4x256xbf16>,
    %c0_77 = arith.constant 0 : index
    %c113 = arith.constant 113 : index
    %66 = vector.load %arg12[%c0_77, %c113] : memref<4x512xf32, #tpu.memory_space<vmem>>, vector<4x256xf32>
    %c2 = arith.constant 2 : index
    %c0_78 = arith.constant 0 : index
    %67 = vector.load %arg8[%c2, %c0_78] : memref<9x256xf32, #tpu.memory_space<vmem>>, vector<1x256xf32>
    %68 = vector.broadcast %67 : vector<1x256xf32> to vector<4x256xf32>
    %69 = arith.mulf %66, %68 : vector<4x256xf32>
    %70 = arith.truncf %69 : vector<4x256xf32> to vector<4x256xbf16>
    %c32 = arith.constant 32 : index
    %c0_79 = arith.constant 0 : index
    %71 = vector.load %arg14[%c32, %c0_79] : memref<144x256xbf16, #tpu.memory_space<vmem>>, vector<4x256xbf16>
    tpu.vector_store %arg14[%c32, %c0_79], %70 {strides = array<i32>} : memref<144x256xbf16, #tpu.memory_space<vmem>>, vector<4x256xbf16>,
    %c0_80 = arith.constant 0 : index
    %c127 = arith.constant 127 : index
    %72 = vector.load %arg12[%c0_80, %c127] : memref<4x512xf32, #tpu.memory_space<vmem>>, vector<4x256xf32>
    %c3 = arith.constant 3 : index
    %c0_81 = arith.constant 0 : index
    %73 = vector.load %arg8[%c3, %c0_81] : memref<9x256xf32, #tpu.memory_space<vmem>>, vector<1x256xf32>
    %74 = vector.broadcast %73 : vector<1x256xf32> to vector<4x256xf32>
    %75 = arith.mulf %72, %74 : vector<4x256xf32>
    %76 = arith.truncf %75 : vector<4x256xf32> to vector<4x256xbf16>
    %c48 = arith.constant 48 : index
    %c0_82 = arith.constant 0 : index
    %77 = vector.load %arg14[%c48, %c0_82] : memref<144x256xbf16, #tpu.memory_space<vmem>>, vector<4x256xbf16>
    tpu.vector_store %arg14[%c48, %c0_82], %76 {strides = array<i32>} : memref<144x256xbf16, #tpu.memory_space<vmem>>, vector<4x256xbf16>,
    %c0_83 = arith.constant 0 : index
    %c128_84 = arith.constant 128 : index
    %78 = vector.load %arg12[%c0_83, %c128_84] : memref<4x512xf32, #tpu.memory_space<vmem>>, vector<4x256xf32>
    %c4_85 = arith.constant 4 : index
    %c0_86 = arith.constant 0 : index
    %79 = vector.load %arg8[%c4_85, %c0_86] : memref<9x256xf32, #tpu.memory_space<vmem>>, vector<1x256xf32>
    %80 = vector.broadcast %79 : vector<1x256xf32> to vector<4x256xf32>
    %81 = arith.mulf %78, %80 : vector<4x256xf32>
    %82 = arith.truncf %81 : vector<4x256xf32> to vector<4x256xbf16>
    %c64 = arith.constant 64 : index
    %c0_87 = arith.constant 0 : index
    %83 = vector.load %arg14[%c64, %c0_87] : memref<144x256xbf16, #tpu.memory_space<vmem>>, vector<4x256xbf16>
    tpu.vector_store %arg14[%c64, %c0_87], %82 {strides = array<i32>} : memref<144x256xbf16, #tpu.memory_space<vmem>>, vector<4x256xbf16>,
    %c0_88 = arith.constant 0 : index
    %c129 = arith.constant 129 : index
    %84 = vector.load %arg12[%c0_88, %c129] : memref<4x512xf32, #tpu.memory_space<vmem>>, vector<4x256xf32>
    %c5 = arith.constant 5 : index
    %c0_89 = arith.constant 0 : index
    %85 = vector.load %arg8[%c5, %c0_89] : memref<9x256xf32, #tpu.memory_space<vmem>>, vector<1x256xf32>
    %86 = vector.broadcast %85 : vector<1x256xf32> to vector<4x256xf32>
    %87 = arith.mulf %84, %86 : vector<4x256xf32>
    %88 = arith.truncf %87 : vector<4x256xf32> to vector<4x256xbf16>
    %c80 = arith.constant 80 : index
    %c0_90 = arith.constant 0 : index
    %89 = vector.load %arg14[%c80, %c0_90] : memref<144x256xbf16, #tpu.memory_space<vmem>>, vector<4x256xbf16>
    tpu.vector_store %arg14[%c80, %c0_90], %88 {strides = array<i32>} : memref<144x256xbf16, #tpu.memory_space<vmem>>, vector<4x256xbf16>,
    %c0_91 = arith.constant 0 : index
    %c143 = arith.constant 143 : index
    %90 = vector.load %arg12[%c0_91, %c143] : memref<4x512xf32, #tpu.memory_space<vmem>>, vector<4x256xf32>
    %c6 = arith.constant 6 : index
    %c0_92 = arith.constant 0 : index
    %91 = vector.load %arg8[%c6, %c0_92] : memref<9x256xf32, #tpu.memory_space<vmem>>, vector<1x256xf32>
    %92 = vector.broadcast %91 : vector<1x256xf32> to vector<4x256xf32>
    %93 = arith.mulf %90, %92 : vector<4x256xf32>
    %94 = arith.truncf %93 : vector<4x256xf32> to vector<4x256xbf16>
    %c96 = arith.constant 96 : index
    %c0_93 = arith.constant 0 : index
    %95 = vector.load %arg14[%c96, %c0_93] : memref<144x256xbf16, #tpu.memory_space<vmem>>, vector<4x256xbf16>
    tpu.vector_store %arg14[%c96, %c0_93], %94 {strides = array<i32>} : memref<144x256xbf16, #tpu.memory_space<vmem>>, vector<4x256xbf16>,
    %c0_94 = arith.constant 0 : index
    %c144 = arith.constant 144 : index
    %96 = vector.load %arg12[%c0_94, %c144] : memref<4x512xf32, #tpu.memory_space<vmem>>, vector<4x256xf32>
    %c7 = arith.constant 7 : index
    %c0_95 = arith.constant 0 : index
    %97 = vector.load %arg8[%c7, %c0_95] : memref<9x256xf32, #tpu.memory_space<vmem>>, vector<1x256xf32>
    %98 = vector.broadcast %97 : vector<1x256xf32> to vector<4x256xf32>
    %99 = arith.mulf %96, %98 : vector<4x256xf32>
    %100 = arith.truncf %99 : vector<4x256xf32> to vector<4x256xbf16>
    %c112_96 = arith.constant 112 : index
    %c0_97 = arith.constant 0 : index
    %101 = vector.load %arg14[%c112_96, %c0_97] : memref<144x256xbf16, #tpu.memory_space<vmem>>, vector<4x256xbf16>
    tpu.vector_store %arg14[%c112_96, %c0_97], %100 {strides = array<i32>} : memref<144x256xbf16, #tpu.memory_space<vmem>>, vector<4x256xbf16>,
    %c0_98 = arith.constant 0 : index
    %c145 = arith.constant 145 : index
    %102 = vector.load %arg12[%c0_98, %c145] : memref<4x512xf32, #tpu.memory_space<vmem>>, vector<4x256xf32>
    %c8 = arith.constant 8 : index
    %c0_99 = arith.constant 0 : index
    %103 = vector.load %arg8[%c8, %c0_99] : memref<9x256xf32, #tpu.memory_space<vmem>>, vector<1x256xf32>
    %104 = vector.broadcast %103 : vector<1x256xf32> to vector<4x256xf32>
    %105 = arith.mulf %102, %104 : vector<4x256xf32>
    %106 = arith.truncf %105 : vector<4x256xf32> to vector<4x256xbf16>
    %c128_100 = arith.constant 128 : index
    %c0_101 = arith.constant 0 : index
    %107 = vector.load %arg14[%c128_100, %c0_101] : memref<144x256xbf16, #tpu.memory_space<vmem>>, vector<4x256xbf16>
    tpu.vector_store %arg14[%c128_100, %c0_101], %106 {strides = array<i32>} : memref<144x256xbf16, #tpu.memory_space<vmem>>, vector<4x256xbf16>,
    %c0_102 = arith.constant 0 : index
    %c0_103 = arith.constant 0 : index
    %108 = vector.load %arg14[%c0_102, %c0_103] : memref<144x256xbf16, #tpu.memory_space<vmem>>, vector<144x256xbf16>
    %cst_104 = arith.constant dense<0.000000e+00> : vector<4x256xf32>
    %109 = tpu.matmul %44, %108, %cst_104 {dimension_numbers = #tpu.dot_dimension_numbers<[1], [0], [0], [1], [0, 0, 1, 1], [], []>} : vector<4x144xbf16>, vector<144x256xbf16>, vector<4x256xf32> -> vector<4x256xf32>
    %110 = vector.broadcast %45 : vector<4x1xf32> to vector<4x256xf32>
    %111 = arith.addf %109, %110 : vector<4x256xf32>
    %cst_105 = arith.constant 0.000000e+00 : f32
    %112 = vector.broadcast %cst_105 : f32 to vector<4x256xf32>
    %113 = arith.cmpf ogt, %111, %112 : vector<4x256xf32>
    %cst_106 = arith.constant 2.000000e-01 : f32
    %114 = vector.broadcast %cst_106 : f32 to vector<4x256xf32>
    %115 = arith.mulf %114, %111 : vector<4x256xf32>
    %116 = arith.select %113, %111, %115 : vector<4x256xi1>, vector<4x256xf32>
    %c0_107 = arith.constant 0 : index
    %c128_108 = arith.constant 128 : index
    %117 = vector.load %arg12[%c0_107, %c128_108] : memref<4x512xf32, #tpu.memory_space<vmem>>, vector<4x256xf32>
    tpu.vector_store %arg12[%c0_107, %c128_108], %116 {strides = array<i32>} : memref<4x512xf32, #tpu.memory_space<vmem>>, vector<4x256xf32>,
    %c0_109 = arith.constant 0 : index
    %c111_110 = arith.constant 111 : index
    %118 = vector.load %arg12[%c0_109, %c111_110] : memref<4x512xf32, #tpu.memory_space<vmem>>, vector<4x256xf32>
    %c0_111 = arith.constant 0 : index
    %c0_112 = arith.constant 0 : index
    %119 = vector.load %arg8[%c0_111, %c0_112] : memref<9x256xf32, #tpu.memory_space<vmem>>, vector<1x256xf32>
    %120 = vector.broadcast %119 : vector<1x256xf32> to vector<4x256xf32>
    %121 = arith.mulf %118, %120 : vector<4x256xf32>
    %122 = arith.truncf %121 : vector<4x256xf32> to vector<4x256xbf16>
    %c0_113 = arith.constant 0 : index
    %c0_114 = arith.constant 0 : index
    %123 = vector.load %arg14[%c0_113, %c0_114] : memref<144x256xbf16, #tpu.memory_space<vmem>>, vector<4x256xbf16>
    tpu.vector_store %arg14[%c0_113, %c0_114], %122 {strides = array<i32>} : memref<144x256xbf16, #tpu.memory_space<vmem>>, vector<4x256xbf16>,
    %c0_115 = arith.constant 0 : index
    %c112_116 = arith.constant 112 : index
    %124 = vector.load %arg12[%c0_115, %c112_116] : memref<4x512xf32, #tpu.memory_space<vmem>>, vector<4x256xf32>
    %c1_117 = arith.constant 1 : index
    %c0_118 = arith.constant 0 : index
    %125 = vector.load %arg8[%c1_117, %c0_118] : memref<9x256xf32, #tpu.memory_space<vmem>>, vector<1x256xf32>
    %126 = vector.broadcast %125 : vector<1x256xf32> to vector<4x256xf32>
    %127 = arith.mulf %124, %126 : vector<4x256xf32>
    %128 = arith.truncf %127 : vector<4x256xf32> to vector<4x256xbf16>
    %c16_119 = arith.constant 16 : index
    %c0_120 = arith.constant 0 : index
    %129 = vector.load %arg14[%c16_119, %c0_120] : memref<144x256xbf16, #tpu.memory_space<vmem>>, vector<4x256xbf16>
    tpu.vector_store %arg14[%c16_119, %c0_120], %128 {strides = array<i32>} : memref<144x256xbf16, #tpu.memory_space<vmem>>, vector<4x256xbf16>,
    %c0_121 = arith.constant 0 : index
    %c113_122 = arith.constant 113 : index
    %130 = vector.load %arg12[%c0_121, %c113_122] : memref<4x512xf32, #tpu.memory_space<vmem>>, vector<4x256xf32>
    %c2_123 = arith.constant 2 : index
    %c0_124 = arith.constant 0 : index
    %131 = vector.load %arg8[%c2_123, %c0_124] : memref<9x256xf32, #tpu.memory_space<vmem>>, vector<1x256xf32>
    %132 = vector.broadcast %131 : vector<1x256xf32> to vector<4x256xf32>
    %133 = arith.mulf %130, %132 : vector<4x256xf32>
    %134 = arith.truncf %133 : vector<4x256xf32> to vector<4x256xbf16>
    %c32_125 = arith.constant 32 : index
    %c0_126 = arith.constant 0 : index
    %135 = vector.load %arg14[%c32_125, %c0_126] : memref<144x256xbf16, #tpu.memory_space<vmem>>, vector<4x256xbf16>
    tpu.vector_store %arg14[%c32_125, %c0_126], %134 {strides = array<i32>} : memref<144x256xbf16, #tpu.memory_space<vmem>>, vector<4x256xbf16>,
    %c0_127 = arith.constant 0 : index
    %c127_128 = arith.constant 127 : index
    %136 = vector.load %arg12[%c0_127, %c127_128] : memref<4x512xf32, #tpu.memory_space<vmem>>, vector<4x256xf32>
    %c3_129 = arith.constant 3 : index
    %c0_130 = arith.constant 0 : index
    %137 = vector.load %arg8[%c3_129, %c0_130] : memref<9x256xf32, #tpu.memory_space<vmem>>, vector<1x256xf32>
    %138 = vector.broadcast %137 : vector<1x256xf32> to vector<4x256xf32>
    %139 = arith.mulf %136, %138 : vector<4x256xf32>
    %140 = arith.truncf %139 : vector<4x256xf32> to vector<4x256xbf16>
    %c48_131 = arith.constant 48 : index
    %c0_132 = arith.constant 0 : index
    %141 = vector.load %arg14[%c48_131, %c0_132] : memref<144x256xbf16, #tpu.memory_space<vmem>>, vector<4x256xbf16>
    tpu.vector_store %arg14[%c48_131, %c0_132], %140 {strides = array<i32>} : memref<144x256xbf16, #tpu.memory_space<vmem>>, vector<4x256xbf16>,
    %c0_133 = arith.constant 0 : index
    %c128_134 = arith.constant 128 : index
    %142 = vector.load %arg12[%c0_133, %c128_134] : memref<4x512xf32, #tpu.memory_space<vmem>>, vector<4x256xf32>
    %c4_135 = arith.constant 4 : index
    %c0_136 = arith.constant 0 : index
    %143 = vector.load %arg8[%c4_135, %c0_136] : memref<9x256xf32, #tpu.memory_space<vmem>>, vector<1x256xf32>
    %144 = vector.broadcast %143 : vector<1x256xf32> to vector<4x256xf32>
    %145 = arith.mulf %142, %144 : vector<4x256xf32>
    %146 = arith.truncf %145 : vector<4x256xf32> to vector<4x256xbf16>
    %c64_137 = arith.constant 64 : index
    %c0_138 = arith.constant 0 : index
    %147 = vector.load %arg14[%c64_137, %c0_138] : memref<144x256xbf16, #tpu.memory_space<vmem>>, vector<4x256xbf16>
    tpu.vector_store %arg14[%c64_137, %c0_138], %146 {strides = array<i32>} : memref<144x256xbf16, #tpu.memory_space<vmem>>, vector<4x256xbf16>,
    %c0_139 = arith.constant 0 : index
    %c129_140 = arith.constant 129 : index
    %148 = vector.load %arg12[%c0_139, %c129_140] : memref<4x512xf32, #tpu.memory_space<vmem>>, vector<4x256xf32>
    %c5_141 = arith.constant 5 : index
    %c0_142 = arith.constant 0 : index
    %149 = vector.load %arg8[%c5_141, %c0_142] : memref<9x256xf32, #tpu.memory_space<vmem>>, vector<1x256xf32>
    %150 = vector.broadcast %149 : vector<1x256xf32> to vector<4x256xf32>
    %151 = arith.mulf %148, %150 : vector<4x256xf32>
    %152 = arith.truncf %151 : vector<4x256xf32> to vector<4x256xbf16>
    %c80_143 = arith.constant 80 : index
    %c0_144 = arith.constant 0 : index
    %153 = vector.load %arg14[%c80_143, %c0_144] : memref<144x256xbf16, #tpu.memory_space<vmem>>, vector<4x256xbf16>
    tpu.vector_store %arg14[%c80_143, %c0_144], %152 {strides = array<i32>} : memref<144x256xbf16, #tpu.memory_space<vmem>>, vector<4x256xbf16>,
    %c0_145 = arith.constant 0 : index
    %c143_146 = arith.constant 143 : index
    %154 = vector.load %arg12[%c0_145, %c143_146] : memref<4x512xf32, #tpu.memory_space<vmem>>, vector<4x256xf32>
    %c6_147 = arith.constant 6 : index
    %c0_148 = arith.constant 0 : index
    %155 = vector.load %arg8[%c6_147, %c0_148] : memref<9x256xf32, #tpu.memory_space<vmem>>, vector<1x256xf32>
    %156 = vector.broadcast %155 : vector<1x256xf32> to vector<4x256xf32>
    %157 = arith.mulf %154, %156 : vector<4x256xf32>
    %158 = arith.truncf %157 : vector<4x256xf32> to vector<4x256xbf16>
    %c96_149 = arith.constant 96 : index
    %c0_150 = arith.constant 0 : index
    %159 = vector.load %arg14[%c96_149, %c0_150] : memref<144x256xbf16, #tpu.memory_space<vmem>>, vector<4x256xbf16>
    tpu.vector_store %arg14[%c96_149, %c0_150], %158 {strides = array<i32>} : memref<144x256xbf16, #tpu.memory_space<vmem>>, vector<4x256xbf16>,
    %c0_151 = arith.constant 0 : index
    %c144_152 = arith.constant 144 : index
    %160 = vector.load %arg12[%c0_151, %c144_152] : memref<4x512xf32, #tpu.memory_space<vmem>>, vector<4x256xf32>
    %c7_153 = arith.constant 7 : index
    %c0_154 = arith.constant 0 : index
    %161 = vector.load %arg8[%c7_153, %c0_154] : memref<9x256xf32, #tpu.memory_space<vmem>>, vector<1x256xf32>
    %162 = vector.broadcast %161 : vector<1x256xf32> to vector<4x256xf32>
    %163 = arith.mulf %160, %162 : vector<4x256xf32>
    %164 = arith.truncf %163 : vector<4x256xf32> to vector<4x256xbf16>
    %c112_155 = arith.constant 112 : index
    %c0_156 = arith.constant 0 : index
    %165 = vector.load %arg14[%c112_155, %c0_156] : memref<144x256xbf16, #tpu.memory_space<vmem>>, vector<4x256xbf16>
    tpu.vector_store %arg14[%c112_155, %c0_156], %164 {strides = array<i32>} : memref<144x256xbf16, #tpu.memory_space<vmem>>, vector<4x256xbf16>,
    %c0_157 = arith.constant 0 : index
    %c145_158 = arith.constant 145 : index
    %166 = vector.load %arg12[%c0_157, %c145_158] : memref<4x512xf32, #tpu.memory_space<vmem>>, vector<4x256xf32>
    %c8_159 = arith.constant 8 : index
    %c0_160 = arith.constant 0 : index
    %167 = vector.load %arg8[%c8_159, %c0_160] : memref<9x256xf32, #tpu.memory_space<vmem>>, vector<1x256xf32>
    %168 = vector.broadcast %167 : vector<1x256xf32> to vector<4x256xf32>
    %169 = arith.mulf %166, %168 : vector<4x256xf32>
    %170 = arith.truncf %169 : vector<4x256xf32> to vector<4x256xbf16>
    %c128_161 = arith.constant 128 : index
    %c0_162 = arith.constant 0 : index
    %171 = vector.load %arg14[%c128_161, %c0_162] : memref<144x256xbf16, #tpu.memory_space<vmem>>, vector<4x256xbf16>
    tpu.vector_store %arg14[%c128_161, %c0_162], %170 {strides = array<i32>} : memref<144x256xbf16, #tpu.memory_space<vmem>>, vector<4x256xbf16>,
    %c0_163 = arith.constant 0 : index
    %c0_164 = arith.constant 0 : index
    %172 = vector.load %arg14[%c0_163, %c0_164] : memref<144x256xbf16, #tpu.memory_space<vmem>>, vector<144x256xbf16>
    %cst_165 = arith.constant dense<0.000000e+00> : vector<8x256xf32>
    %173 = tpu.matmul %46, %172, %cst_165 {dimension_numbers = #tpu.dot_dimension_numbers<[1], [0], [0], [1], [0, 0, 1, 1], [], []>} : vector<8x144xbf16>, vector<144x256xbf16>, vector<8x256xf32> -> vector<8x256xf32>
    %174 = vector.broadcast %47 : vector<8x1xf32> to vector<8x256xf32>
    %175 = arith.addf %173, %174 : vector<8x256xf32>
    %176 = arith.truncf %175 : vector<8x256xf32> to vector<8x256xbf16>
    %c0_166 = arith.constant 0 : index
    %c0_167 = arith.constant 0 : index
    %177 = vector.load %arg16[%c0_166, %c0_167] : memref<12x256xbf16, #tpu.memory_space<vmem>>, vector<8x256xbf16>
    tpu.vector_store %arg16[%c0_166, %c0_167], %176 {strides = array<i32>} : memref<12x256xbf16, #tpu.memory_space<vmem>>, vector<8x256xbf16>,
    %c8_168 = arith.constant 8 : index
    %c0_169 = arith.constant 0 : index
    %178 = vector.load %arg16[%c8_168, %c0_169] : memref<12x256xbf16, #tpu.memory_space<vmem>>, vector<4x256xbf16>
    tpu.vector_store %arg16[%c8_168, %c0_169], %51 {strides = array<i32>} : memref<12x256xbf16, #tpu.memory_space<vmem>>, vector<4x256xbf16>,
    %c0_170 = arith.constant 0 : index
    %c0_171 = arith.constant 0 : index
    %179 = vector.load %arg16[%c0_170, %c0_171] : memref<12x256xbf16, #tpu.memory_space<vmem>>, vector<12x256xbf16>
    %c0_172 = arith.constant 0 : index
    %c0_173 = arith.constant 0 : index
    %180 = vector.load %arg10[%c0_172, %c0_173] : memref<256x64xbf16, #tpu.memory_space<vmem>>, vector<256x64xbf16>
    %cst_174 = arith.constant dense<0.000000e+00> : vector<12x64xf32>
    %181 = tpu.matmul %179, %180, %cst_174 {dimension_numbers = #tpu.dot_dimension_numbers<[1], [0], [0], [1], [0, 0, 1, 1], [], []>} : vector<12x256xbf16>, vector<256x64xbf16>, vector<12x64xf32> -> vector<12x64xf32>
    %182 = vector.extract_strided_slice %181 {offsets = [0, 0], sizes = [8, 64], strides = [1, 1]} : vector<12x64xf32> to vector<8x64xf32>
    %cst_175 = arith.constant 0.000000e+00 : f32
    %183 = vector.broadcast %cst_175 : f32 to vector<8x64xf32>
    %184 = arith.cmpf ogt, %182, %183 : vector<8x64xf32>
    %cst_176 = arith.constant 2.000000e-01 : f32
    %185 = vector.broadcast %cst_176 : f32 to vector<8x64xf32>
    %186 = arith.mulf %185, %182 : vector<8x64xf32>
    %187 = arith.select %184, %182, %186 : vector<8x64xi1>, vector<8x64xf32>
    %188 = vector.extract_strided_slice %181 {offsets = [8, 0], sizes = [4, 64], strides = [1, 1]} : vector<12x64xf32> to vector<4x64xf32>
    %c0_177 = arith.constant 0 : index
    %c128_178 = arith.constant 128 : index
    %189 = vector.load %arg13[%c0_177, %c128_178] : memref<4x320xf32, #tpu.memory_space<vmem>>, vector<4x64xf32>
    tpu.vector_store %arg13[%c0_177, %c128_178], %188 {strides = array<i32>} : memref<4x320xf32, #tpu.memory_space<vmem>>, vector<4x64xf32>,
    %c0_179 = arith.constant 0 : index
    %c119 = arith.constant 119 : index
    %190 = vector.load %arg13[%c0_179, %c119] : memref<4x320xf32, #tpu.memory_space<vmem>>, vector<4x64xf32>
    %c0_180 = arith.constant 0 : index
    %c0_181 = arith.constant 0 : index
    %191 = vector.load %arg9[%c0_180, %c0_181] : memref<9x64xf32, #tpu.memory_space<vmem>>, vector<1x64xf32>
    %192 = vector.broadcast %191 : vector<1x64xf32> to vector<4x64xf32>
    %193 = arith.mulf %190, %192 : vector<4x64xf32>
    %194 = arith.truncf %193 : vector<4x64xf32> to vector<4x64xbf16>
    %c0_182 = arith.constant 0 : index
    %c0_183 = arith.constant 0 : index
    %195 = vector.load %arg15[%c0_182, %c0_183] : memref<144x64xbf16, #tpu.memory_space<vmem>>, vector<4x64xbf16>
    tpu.vector_store %arg15[%c0_182, %c0_183], %194 {strides = array<i32>} : memref<144x64xbf16, #tpu.memory_space<vmem>>, vector<4x64xbf16>,
    %c0_184 = arith.constant 0 : index
    %c120 = arith.constant 120 : index
    %196 = vector.load %arg13[%c0_184, %c120] : memref<4x320xf32, #tpu.memory_space<vmem>>, vector<4x64xf32>
    %c1_185 = arith.constant 1 : index
    %c0_186 = arith.constant 0 : index
    %197 = vector.load %arg9[%c1_185, %c0_186] : memref<9x64xf32, #tpu.memory_space<vmem>>, vector<1x64xf32>
    %198 = vector.broadcast %197 : vector<1x64xf32> to vector<4x64xf32>
    %199 = arith.mulf %196, %198 : vector<4x64xf32>
    %200 = arith.truncf %199 : vector<4x64xf32> to vector<4x64xbf16>
    %c16_187 = arith.constant 16 : index
    %c0_188 = arith.constant 0 : index
    %201 = vector.load %arg15[%c16_187, %c0_188] : memref<144x64xbf16, #tpu.memory_space<vmem>>, vector<4x64xbf16>
    tpu.vector_store %arg15[%c16_187, %c0_188], %200 {strides = array<i32>} : memref<144x64xbf16, #tpu.memory_space<vmem>>, vector<4x64xbf16>,
    %c0_189 = arith.constant 0 : index
    %c121 = arith.constant 121 : index
    %202 = vector.load %arg13[%c0_189, %c121] : memref<4x320xf32, #tpu.memory_space<vmem>>, vector<4x64xf32>
    %c2_190 = arith.constant 2 : index
    %c0_191 = arith.constant 0 : index
    %203 = vector.load %arg9[%c2_190, %c0_191] : memref<9x64xf32, #tpu.memory_space<vmem>>, vector<1x64xf32>
    %204 = vector.broadcast %203 : vector<1x64xf32> to vector<4x64xf32>
    %205 = arith.mulf %202, %204 : vector<4x64xf32>
    %206 = arith.truncf %205 : vector<4x64xf32> to vector<4x64xbf16>
    %c32_192 = arith.constant 32 : index
    %c0_193 = arith.constant 0 : index
    %207 = vector.load %arg15[%c32_192, %c0_193] : memref<144x64xbf16, #tpu.memory_space<vmem>>, vector<4x64xbf16>
    tpu.vector_store %arg15[%c32_192, %c0_193], %206 {strides = array<i32>} : memref<144x64xbf16, #tpu.memory_space<vmem>>, vector<4x64xbf16>,
    %c0_194 = arith.constant 0 : index
    %c127_195 = arith.constant 127 : index
    %208 = vector.load %arg13[%c0_194, %c127_195] : memref<4x320xf32, #tpu.memory_space<vmem>>, vector<4x64xf32>
    %c3_196 = arith.constant 3 : index
    %c0_197 = arith.constant 0 : index
    %209 = vector.load %arg9[%c3_196, %c0_197] : memref<9x64xf32, #tpu.memory_space<vmem>>, vector<1x64xf32>
    %210 = vector.broadcast %209 : vector<1x64xf32> to vector<4x64xf32>
    %211 = arith.mulf %208, %210 : vector<4x64xf32>
    %212 = arith.truncf %211 : vector<4x64xf32> to vector<4x64xbf16>
    %c48_198 = arith.constant 48 : index
    %c0_199 = arith.constant 0 : index
    %213 = vector.load %arg15[%c48_198, %c0_199] : memref<144x64xbf16, #tpu.memory_space<vmem>>, vector<4x64xbf16>
    tpu.vector_store %arg15[%c48_198, %c0_199], %212 {strides = array<i32>} : memref<144x64xbf16, #tpu.memory_space<vmem>>, vector<4x64xbf16>,
    %c0_200 = arith.constant 0 : index
    %c128_201 = arith.constant 128 : index
    %214 = vector.load %arg13[%c0_200, %c128_201] : memref<4x320xf32, #tpu.memory_space<vmem>>, vector<4x64xf32>
    %c4_202 = arith.constant 4 : index
    %c0_203 = arith.constant 0 : index
    %215 = vector.load %arg9[%c4_202, %c0_203] : memref<9x64xf32, #tpu.memory_space<vmem>>, vector<1x64xf32>
    %216 = vector.broadcast %215 : vector<1x64xf32> to vector<4x64xf32>
    %217 = arith.mulf %214, %216 : vector<4x64xf32>
    %218 = arith.truncf %217 : vector<4x64xf32> to vector<4x64xbf16>
    %c64_204 = arith.constant 64 : index
    %c0_205 = arith.constant 0 : index
    %219 = vector.load %arg15[%c64_204, %c0_205] : memref<144x64xbf16, #tpu.memory_space<vmem>>, vector<4x64xbf16>
    tpu.vector_store %arg15[%c64_204, %c0_205], %218 {strides = array<i32>} : memref<144x64xbf16, #tpu.memory_space<vmem>>, vector<4x64xbf16>,
    %c0_206 = arith.constant 0 : index
    %c129_207 = arith.constant 129 : index
    %220 = vector.load %arg13[%c0_206, %c129_207] : memref<4x320xf32, #tpu.memory_space<vmem>>, vector<4x64xf32>
    %c5_208 = arith.constant 5 : index
    %c0_209 = arith.constant 0 : index
    %221 = vector.load %arg9[%c5_208, %c0_209] : memref<9x64xf32, #tpu.memory_space<vmem>>, vector<1x64xf32>
    %222 = vector.broadcast %221 : vector<1x64xf32> to vector<4x64xf32>
    %223 = arith.mulf %220, %222 : vector<4x64xf32>
    %224 = arith.truncf %223 : vector<4x64xf32> to vector<4x64xbf16>
    %c80_210 = arith.constant 80 : index
    %c0_211 = arith.constant 0 : index
    %225 = vector.load %arg15[%c80_210, %c0_211] : memref<144x64xbf16, #tpu.memory_space<vmem>>, vector<4x64xbf16>
    tpu.vector_store %arg15[%c80_210, %c0_211], %224 {strides = array<i32>} : memref<144x64xbf16, #tpu.memory_space<vmem>>, vector<4x64xbf16>,
    %c0_212 = arith.constant 0 : index
    %c135 = arith.constant 135 : index
    %226 = vector.load %arg13[%c0_212, %c135] : memref<4x320xf32, #tpu.memory_space<vmem>>, vector<4x64xf32>
    %c6_213 = arith.constant 6 : index
    %c0_214 = arith.constant 0 : index
    %227 = vector.load %arg9[%c6_213, %c0_214] : memref<9x64xf32, #tpu.memory_space<vmem>>, vector<1x64xf32>
    %228 = vector.broadcast %227 : vector<1x64xf32> to vector<4x64xf32>
    %229 = arith.mulf %226, %228 : vector<4x64xf32>
    %230 = arith.truncf %229 : vector<4x64xf32> to vector<4x64xbf16>
    %c96_215 = arith.constant 96 : index
    %c0_216 = arith.constant 0 : index
    %231 = vector.load %arg15[%c96_215, %c0_216] : memref<144x64xbf16, #tpu.memory_space<vmem>>, vector<4x64xbf16>
    tpu.vector_store %arg15[%c96_215, %c0_216], %230 {strides = array<i32>} : memref<144x64xbf16, #tpu.memory_space<vmem>>, vector<4x64xbf16>,
    %c0_217 = arith.constant 0 : index
    %c136 = arith.constant 136 : index
    %232 = vector.load %arg13[%c0_217, %c136] : memref<4x320xf32, #tpu.memory_space<vmem>>, vector<4x64xf32>
    %c7_218 = arith.constant 7 : index
    %c0_219 = arith.constant 0 : index
    %233 = vector.load %arg9[%c7_218, %c0_219] : memref<9x64xf32, #tpu.memory_space<vmem>>, vector<1x64xf32>
    %234 = vector.broadcast %233 : vector<1x64xf32> to vector<4x64xf32>
    %235 = arith.mulf %232, %234 : vector<4x64xf32>
    %236 = arith.truncf %235 : vector<4x64xf32> to vector<4x64xbf16>
    %c112_220 = arith.constant 112 : index
    %c0_221 = arith.constant 0 : index
    %237 = vector.load %arg15[%c112_220, %c0_221] : memref<144x64xbf16, #tpu.memory_space<vmem>>, vector<4x64xbf16>
    tpu.vector_store %arg15[%c112_220, %c0_221], %236 {strides = array<i32>} : memref<144x64xbf16, #tpu.memory_space<vmem>>, vector<4x64xbf16>,
    %c0_222 = arith.constant 0 : index
    %c137 = arith.constant 137 : index
    %238 = vector.load %arg13[%c0_222, %c137] : memref<4x320xf32, #tpu.memory_space<vmem>>, vector<4x64xf32>
    %c8_223 = arith.constant 8 : index
    %c0_224 = arith.constant 0 : index
    %239 = vector.load %arg9[%c8_223, %c0_224] : memref<9x64xf32, #tpu.memory_space<vmem>>, vector<1x64xf32>
    %240 = vector.broadcast %239 : vector<1x64xf32> to vector<4x64xf32>
    %241 = arith.mulf %238, %240 : vector<4x64xf32>
    %242 = arith.truncf %241 : vector<4x64xf32> to vector<4x64xbf16>
    %c128_225 = arith.constant 128 : index
    %c0_226 = arith.constant 0 : index
    %243 = vector.load %arg15[%c128_225, %c0_226] : memref<144x64xbf16, #tpu.memory_space<vmem>>, vector<4x64xbf16>
    tpu.vector_store %arg15[%c128_225, %c0_226], %242 {strides = array<i32>} : memref<144x64xbf16, #tpu.memory_space<vmem>>, vector<4x64xbf16>,
    %c0_227 = arith.constant 0 : index
    %c0_228 = arith.constant 0 : index
    %244 = vector.load %arg15[%c0_227, %c0_228] : memref<144x64xbf16, #tpu.memory_space<vmem>>, vector<144x64xbf16>
    %cst_229 = arith.constant dense<0.000000e+00> : vector<8x64xf32>
    %245 = tpu.matmul %48, %244, %cst_229 {dimension_numbers = #tpu.dot_dimension_numbers<[1], [0], [0], [1], [0, 0, 1, 1], [], []>} : vector<8x144xbf16>, vector<144x64xbf16>, vector<8x64xf32> -> vector<8x64xf32>
    %246 = vector.broadcast %49 : vector<8x1xf32> to vector<8x64xf32>
    %247 = arith.addf %245, %246 : vector<8x64xf32>
    %248 = arith.addf %187, %247 : vector<8x64xf32>
    %c0_230 = arith.constant 0 : index
    %c0_231 = arith.constant 0 : index
    %c0_232 = arith.constant 0 : index
    %249 = vector.load %arg11[%c0_230, %c0_231, %c0_232] : memref<1x8x64xf32, #tpu.memory_space<vmem>>, vector<1x8x64xf32>
    %250 = vector.shape_cast %249 : vector<1x8x64xf32> to vector<8x64xf32>
    %251 = vector.shape_cast %248 : vector<8x64xf32> to vector<1x8x64xf32>
    tpu.vector_store %arg11[%c0_230, %c0_231, %c0_232], %251 {strides = array<i32>} : memref<1x8x64xf32, #tpu.memory_space<vmem>>, vector<1x8x64xf32>,
    return
  }
  func.func @transform_0(%arg0: i32) -> (i32, i32, i32) {
    %c0_i32 = arith.constant 0 : i32
    %c0_i32_0 = arith.constant 0 : i32
    %c0_i32_1 = arith.constant 0 : i32
    return %arg0, %c0_i32, %c0_i32_0 : i32, i32, i32
  }
  func.func @transform_1(%arg0: i32) -> (i32, i32) {
    %c0_i32 = arith.constant 0 : i32
    %c0_i32_0 = arith.constant 0 : i32
    %c0_i32_1 = arith.constant 0 : i32
    return %c0_i32, %c0_i32_0 : i32, i32
  }
  func.func @transform_2(%arg0: i32) -> (i32, i32) {
    %c0_i32 = arith.constant 0 : i32
    %c0_i32_0 = arith.constant 0 : i32
    %c0_i32_1 = arith.constant 0 : i32
    return %c0_i32, %c0_i32_0 : i32, i32
  }
  func.func @transform_3(%arg0: i32) -> (i32, i32) {
    %c0_i32 = arith.constant 0 : i32
    %c0_i32_0 = arith.constant 0 : i32
    %c0_i32_1 = arith.constant 0 : i32
    return %c0_i32, %c0_i32_0 : i32, i32
  }
  func.func @transform_4(%arg0: i32) -> (i32, i32) {
    %c0_i32 = arith.constant 0 : i32
    %c0_i32_0 = arith.constant 0 : i32
    %c0_i32_1 = arith.constant 0 : i32
    return %c0_i32, %c0_i32_0 : i32, i32
  }
  func.func @transform_5(%arg0: i32) -> (i32, i32) {
    %c0_i32 = arith.constant 0 : i32
    %c0_i32_0 = arith.constant 0 : i32
    %c0_i32_1 = arith.constant 0 : i32
    return %c0_i32, %c0_i32_0 : i32, i32
  }
  func.func @transform_6(%arg0: i32) -> (i32, i32) {
    %c0_i32 = arith.constant 0 : i32
    %c0_i32_0 = arith.constant 0 : i32
    %c0_i32_1 = arith.constant 0 : i32
    return %c0_i32, %c0_i32_0 : i32, i32
  }
  func.func @transform_7(%arg0: i32) -> (i32, i32) {
    %c0_i32 = arith.constant 0 : i32
    %c0_i32_0 = arith.constant 0 : i32
    %c0_i32_1 = arith.constant 0 : i32
    return %c0_i32, %c0_i32_0 : i32, i32
  }
  func.func @transform_8(%arg0: i32) -> (i32, i32) {
    %c0_i32 = arith.constant 0 : i32
    %c0_i32_0 = arith.constant 0 : i32
    %c0_i32_1 = arith.constant 0 : i32
    return %c0_i32, %c0_i32_0 : i32, i32
  }
  func.func @transform_9(%arg0: i32) -> (i32, i32) {
    %c0_i32 = arith.constant 0 : i32
    %c0_i32_0 = arith.constant 0 : i32
    %c0_i32_1 = arith.constant 0 : i32
    return %c0_i32, %c0_i32_0 : i32, i32
  }
  func.func @transform_10(%arg0: i32) -> (i32, i32, i32) {
    %c0_i32 = arith.constant 0 : i32
    %c0_i32_0 = arith.constant 0 : i32
    %c0_i32_1 = arith.constant 0 : i32
    return %arg0, %c0_i32, %c0_i32_0 : i32, i32, i32
  }
}

</mosaic_0001>

<llo_original>
// kernel: tpu_custom_call.1
$region0: #{tpu_custom_call.1}
  #allocation0 [shape = 'u32[]', space=smem, size = 0x4, offset = 0x4, fixed_abs, tag = 'smem constant byte address 0x4 - core index']
  #allocation1 [shape = 'u32[144,128]{1,0:T(1,128)}', space=vmem, size = 0x12000, scoped, tag = 'internal scratch']
  #allocation2 [shape = 'f32[4,512]{1,0:T(4,128)}', space=vmem, size = 0x2000, scoped, tag = 'scratch operand']
  #allocation3 [shape = 'f32[4,320]{1,0:T(4,128)}', space=vmem, size = 0x1800, scoped, tag = 'scratch operand']
  #allocation4 [shape = 'bf16[144,256]{1,0:T(16,128)(2,1)}', space=vmem, size = 0x12000, scoped, tag = 'scratch operand']
  #allocation5 [shape = 'bf16[144,64]{1,0:T(16,128)(2,1)}', space=vmem, size = 0x9000, scoped, tag = 'scratch operand']
  #allocation6 [shape = 'bf16[12,256]{1,0:T(8,128)(2,1)}', space=vmem, size = 0x2000, scoped, tag = 'scratch operand']
  %s0 = inlined_call_operand.vmem [shape: bf16[2,4,256], index: 0, kind: input, shape index: {}]
  %s1 = inlined_call_operand.vmem [shape: bf16[4,144], index: 1, kind: input, shape index: {}]
  %s2 = inlined_call_operand.vmem [shape: f32[4,1], index: 2, kind: input, shape index: {}]
  %s3 = inlined_call_operand.vmem [shape: bf16[8,144], index: 3, kind: input, shape index: {}]
  %s4 = inlined_call_operand.vmem [shape: f32[8,1], index: 4, kind: input, shape index: {}]
  %s5 = inlined_call_operand.vmem [shape: bf16[8,144], index: 5, kind: input, shape index: {}]
  %s6 = inlined_call_operand.vmem [shape: f32[8,1], index: 6, kind: input, shape index: {}]
  %s7 = inlined_call_operand.vmem [shape: f32[9,256], index: 7, kind: input, shape index: {}]
  %s8 = inlined_call_operand.vmem [shape: f32[9,64], index: 8, kind: input, shape index: {}]
  %s9 = inlined_call_operand.vmem [shape: bf16[256,64], index: 9, kind: input, shape index: {}]
  %s10 = inlined_call_operand.hbm [shape: f32[2,8,64], index: 10, kind: output, shape index: {}]
  %s11 = sld [smem:[#allocation0]]
  $region73: #{tpu_custom_call.1} parent=0
    _
  %s13 = ssub.s32 1, %s11
  %s14 = scalar_select 0, %s13, %s11
  $region1: #{tpu_custom_call.1} parent=0
    #allocation7 [shape = 'u8[8192]{0}', space=vmem, size = 0x2000, scoped, tag = 'output window, operand 0']
    #allocation8 [shape = 's32[2]{0}', space=sflag, size = 0x8, scoped, tag = 'scoped memory for tpu_custom_call.1']
    %15 = vsyncpa [#allocation8], 0
    %s16 = scalar_lea.sflag [#allocation8], 1
    %17 = vsyncpa %s16, 0
    loop: start=0, step=1, limit=4
    $region2: #{tpu_custom_call.1} parent=1 // loop_pre_header
      _
    $region3: #{tpu_custom_call.1} parent=1 // loop_header
      %s19 = sphi 0, %s23
      %p20 = scmp.ge.s32.totalorder %s19, 4
      %s29 = sphi 0, %s31
      %s32 = sphi 0, %s29
      %s33 = sphi 0, %s32
      %s49 = sphi 0, %s33
      %s53 = sphi 0, %s53
      %s55 = sphi 0, %s53
      %s56 = sphi 0, %s55
      %s70 = sphi 0, %s56
      %s74 = sphi 0, %s74
      %s76 = sphi 0, %s74
      %s77 = sphi 0, %s76
      %s91 = sphi 0, %s77
      %s95 = sphi 0, %s95
      %s97 = sphi 0, %s95
      %s98 = sphi 0, %s97
      %s112 = sphi 0, %s98
      %s116 = sphi 0, %s116
      %s118 = sphi 0, %s116
      %s119 = sphi 0, %s118
      %s133 = sphi 0, %s119
      %s137 = sphi 0, %s137
      %s139 = sphi 0, %s137
      %s140 = sphi 0, %s139
      %s154 = sphi 0, %s140
      %s158 = sphi 0, %s158
      %s160 = sphi 0, %s158
      %s161 = sphi 0, %s160
      %s175 = sphi 0, %s161
      %s179 = sphi 0, %s179
      %s181 = sphi 0, %s179
      %s182 = sphi 0, %s181
      %s196 = sphi 0, %s182
      %s200 = sphi 0, %s200
      %s202 = sphi 0, %s200
      %s203 = sphi 0, %s202
      %s217 = sphi 0, %s203
      %s221 = sphi 0, %s221
      %s223 = sphi 0, %s221
      %s224 = sphi 0, %s223
      %s238 = sphi 0, %s224
      %s244 = sphi 0, %s246
      %s247 = sphi 0, %s244
      %s248 = sphi 0, %s247
      %s264 = sphi 0, %s248
    $region4: #{tpu_custom_call.1} parent=1 // loop_header_branch
      %22 = sbr.rel (%p20) target = $region8
    $region5: #{tpu_custom_call.1} parent=1 // loop_body
      %s24 = ssub.s32 %s19, 1
      %s25 = ssub.s32 %s19, 2
      %s26 = sadd.s32 %s19, 1
      %s27 = ssub.s32 %s19, %s26
      %p28 = scmp.eq.s32.totalorder %s27, 0
      %s30 = sadd.s32 %s29, 1
      %s31 = scalar_select %p28, %s29, %s30
      %p34 = pneg %p28
      %p35 = scmp.eq.s32.totalorder %s19, 1
      %p36 = por %p34, %p35
      %p37 = scmp.ne.s32.totalorder %s29, %s32
      %p38 = scmp.eq.s32.totalorder %s19, 0
      %p39 = por %p37, %p38
      %p40 = scmp.ne.s32.totalorder %s29, %s32
      %p41 = scmp.eq.s32.totalorder %s24, 1
      %p42 = por %p40, %p41
      %p43 = scmp.ne.s32.totalorder %s32, %s33
      %p44 = scmp.eq.s32.totalorder %s24, 0
      %p45 = por %p43, %p44
      %p46 = scmp.ne.s32.totalorder %s32, %s33
      %p47 = scmp.eq.s32.totalorder %s25, 1
      %p48 = por %p46, %p47
      %p50 = scmp.ne.s32.totalorder %s33, %s49
      %p51 = scmp.eq.s32.totalorder %s25, 0
      %p52 = por %p50, %p51
      %s54 = sadd.s32 %s53, 1
      %p57 = scmp.eq.s32.totalorder %s19, 1
      %p58 = scmp.ne.s32.totalorder %s53, %s55
      %p59 = scmp.eq.s32.totalorder %s19, 0
      %p60 = por %p58, %p59
      %p61 = scmp.ne.s32.totalorder %s53, %s55
      %p62 = scmp.eq.s32.totalorder %s24, 1
      %p63 = por %p61, %p62
      %p64 = scmp.ne.s32.totalorder %s55, %s56
      %p65 = scmp.eq.s32.totalorder %s24, 0
      %p66 = por %p64, %p65
      %p67 = scmp.ne.s32.totalorder %s55, %s56
      %p68 = scmp.eq.s32.totalorder %s25, 1
      %p69 = por %p67, %p68
      %p71 = scmp.ne.s32.totalorder %s56, %s70
      %p72 = scmp.eq.s32.totalorder %s25, 0
      %p73 = por %p71, %p72
      %s75 = sadd.s32 %s74, 1
      %p78 = scmp.eq.s32.totalorder %s19, 1
      %p79 = scmp.ne.s32.totalorder %s74, %s76
      %p80 = scmp.eq.s32.totalorder %s19, 0
      %p81 = por %p79, %p80
      %p82 = scmp.ne.s32.totalorder %s74, %s76
      %p83 = scmp.eq.s32.totalorder %s24, 1
      %p84 = por %p82, %p83
      %p85 = scmp.ne.s32.totalorder %s76, %s77
      %p86 = scmp.eq.s32.totalorder %s24, 0
      %p87 = por %p85, %p86
      %p88 = scmp.ne.s32.totalorder %s76, %s77
      %p89 = scmp.eq.s32.totalorder %s25, 1
      %p90 = por %p88, %p89
      %p92 = scmp.ne.s32.totalorder %s77, %s91
      %p93 = scmp.eq.s32.totalorder %s25, 0
      %p94 = por %p92, %p93
      %s96 = sadd.s32 %s95, 1
      %p99 = scmp.eq.s32.totalorder %s19, 1
      %p100 = scmp.ne.s32.totalorder %s95, %s97
      %p101 = scmp.eq.s32.totalorder %s19, 0
      %p102 = por %p100, %p101
      %p103 = scmp.ne.s32.totalorder %s95, %s97
      %p104 = scmp.eq.s32.totalorder %s24, 1
      %p105 = por %p103, %p104
      %p106 = scmp.ne.s32.totalorder %s97, %s98
      %p107 = scmp.eq.s32.totalorder %s24, 0
      %p108 = por %p106, %p107
      %p109 = scmp.ne.s32.totalorder %s97, %s98
      %p110 = scmp.eq.s32.totalorder %s25, 1
      %p111 = por %p109, %p110
      %p113 = scmp.ne.s32.totalorder %s98, %s112
      %p114 = scmp.eq.s32.totalorder %s25, 0
      %p115 = por %p113, %p114
      %s117 = sadd.s32 %s116, 1
      %p120 = scmp.eq.s32.totalorder %s19, 1
      %p121 = scmp.ne.s32.totalorder %s116, %s118
      %p122 = scmp.eq.s32.totalorder %s19, 0
      %p123 = por %p121, %p122
      %p124 = scmp.ne.s32.totalorder %s116, %s118
      %p125 = scmp.eq.s32.totalorder %s24, 1
      %p126 = por %p124, %p125
      %p127 = scmp.ne.s32.totalorder %s118, %s119
      %p128 = scmp.eq.s32.totalorder %s24, 0
      %p129 = por %p127, %p128
      %p130 = scmp.ne.s32.totalorder %s118, %s119
      %p131 = scmp.eq.s32.totalorder %s25, 1
      %p132 = por %p130, %p131
      %p134 = scmp.ne.s32.totalorder %s119, %s133
      %p135 = scmp.eq.s32.totalorder %s25, 0
      %p136 = por %p134, %p135
      %s138 = sadd.s32 %s137, 1
      %p141 = scmp.eq.s32.totalorder %s19, 1
      %p142 = scmp.ne.s32.totalorder %s137, %s139
      %p143 = scmp.eq.s32.totalorder %s19, 0
      %p144 = por %p142, %p143
      %p145 = scmp.ne.s32.totalorder %s137, %s139
      %p146 = scmp.eq.s32.totalorder %s24, 1
      %p147 = por %p145, %p146
      %p148 = scmp.ne.s32.totalorder %s139, %s140
      %p149 = scmp.eq.s32.totalorder %s24, 0
      %p150 = por %p148, %p149
      %p151 = scmp.ne.s32.totalorder %s139, %s140
      %p152 = scmp.eq.s32.totalorder %s25, 1
      %p153 = por %p151, %p152
      %p155 = scmp.ne.s32.totalorder %s140, %s154
      %p156 = scmp.eq.s32.totalorder %s25, 0
      %p157 = por %p155, %p156
      %s159 = sadd.s32 %s158, 1
      %p162 = scmp.eq.s32.totalorder %s19, 1
      %p163 = scmp.ne.s32.totalorder %s158, %s160
      %p164 = scmp.eq.s32.totalorder %s19, 0
      %p165 = por %p163, %p164
      %p166 = scmp.ne.s32.totalorder %s158, %s160
      %p167 = scmp.eq.s32.totalorder %s24, 1
      %p168 = por %p166, %p167
      %p169 = scmp.ne.s32.totalorder %s160, %s161
      %p170 = scmp.eq.s32.totalorder %s24, 0
      %p171 = por %p169, %p170
      %p172 = scmp.ne.s32.totalorder %s160, %s161
      %p173 = scmp.eq.s32.totalorder %s25, 1
      %p174 = por %p172, %p173
      %p176 = scmp.ne.s32.totalorder %s161, %s175
      %p177 = scmp.eq.s32.totalorder %s25, 0
      %p178 = por %p176, %p177
      %s180 = sadd.s32 %s179, 1
      %p183 = scmp.eq.s32.totalorder %s19, 1
      %p184 = scmp.ne.s32.totalorder %s179, %s181
      %p185 = scmp.eq.s32.totalorder %s19, 0
      %p186 = por %p184, %p185
      %p187 = scmp.ne.s32.totalorder %s179, %s181
      %p188 = scmp.eq.s32.totalorder %s24, 1
      %p189 = por %p187, %p188
      %p190 = scmp.ne.s32.totalorder %s181, %s182
      %p191 = scmp.eq.s32.totalorder %s24, 0
      %p192 = por %p190, %p191
      %p193 = scmp.ne.s32.totalorder %s181, %s182
      %p194 = scmp.eq.s32.totalorder %s25, 1
      %p195 = por %p193, %p194
      %p197 = scmp.ne.s32.totalorder %s182, %s196
      %p198 = scmp.eq.s32.totalorder %s25, 0
      %p199 = por %p197, %p198
      %s201 = sadd.s32 %s200, 1
      %p204 = scmp.eq.s32.totalorder %s19, 1
      %p205 = scmp.ne.s32.totalorder %s200, %s202
      %p206 = scmp.eq.s32.totalorder %s19, 0
      %p207 = por %p205, %p206
      %p208 = scmp.ne.s32.totalorder %s200, %s202
      %p209 = scmp.eq.s32.totalorder %s24, 1
      %p210 = por %p208, %p209
      %p211 = scmp.ne.s32.totalorder %s202, %s203
      %p212 = scmp.eq.s32.totalorder %s24, 0
      %p213 = por %p211, %p212
      %p214 = scmp.ne.s32.totalorder %s202, %s203
      %p215 = scmp.eq.s32.totalorder %s25, 1
      %p216 = por %p214, %p215
      %p218 = scmp.ne.s32.totalorder %s203, %s217
      %p219 = scmp.eq.s32.totalorder %s25, 0
      %p220 = por %p218, %p219
      %s222 = sadd.s32 %s221, 1
      %p225 = scmp.eq.s32.totalorder %s19, 1
      %p226 = scmp.ne.s32.totalorder %s221, %s223
      %p227 = scmp.eq.s32.totalorder %s19, 0
      %p228 = por %p226, %p227
      %p229 = scmp.ne.s32.totalorder %s221, %s223
      %p230 = scmp.eq.s32.totalorder %s24, 1
      %p231 = por %p229, %p230
      %p232 = scmp.ne.s32.totalorder %s223, %s224
      %p233 = scmp.eq.s32.totalorder %s24, 0
      %p234 = por %p232, %p233
      %p235 = scmp.ne.s32.totalorder %s223, %s224
      %p236 = scmp.eq.s32.totalorder %s25, 1
      %p237 = por %p235, %p236
      %p239 = scmp.ne.s32.totalorder %s224, %s238
      %p240 = scmp.eq.s32.totalorder %s25, 0
      %p241 = por %p239, %p240
      %s242 = ssub.s32 %s19, %s26
      %p243 = scmp.eq.s32.totalorder %s242, 0
      %s245 = sadd.s32 %s244, 1
      %s246 = scalar_select %p243, %s244, %s245
      %p249 = pneg %p243
      %p250 = scmp.eq.s32.totalorder %s19, 1
      %p251 = por %p249, %p250
      %p252 = scmp.ne.s32.totalorder %s244, %s247
      %p253 = scmp.eq.s32.totalorder %s19, 0
      %p254 = por %p252, %p253
      %p255 = scmp.ne.s32.totalorder %s244, %s247
      %p256 = scmp.eq.s32.totalorder %s24, 1
      %p257 = por %p255, %p256
      %p258 = scmp.ne.s32.totalorder %s247, %s248
      %p259 = scmp.eq.s32.totalorder %s24, 0
      %p260 = por %p258, %p259
      %p261 = scmp.ne.s32.totalorder %s247, %s248
      %p262 = scmp.eq.s32.totalorder %s25, 1
      %p263 = por %p261, %p262
      %p265 = scmp.ne.s32.totalorder %s248, %s264
      %p266 = scmp.eq.s32.totalorder %s25, 0
      %p267 = por %p265, %p266
      %p268 = scmp.le.s32.totalorder 1, %s19
      %p269 = scmp.lt.s32.totalorder %s19, 3
      %p270 = pnand %p268, %p269
      %p271 = pneg %p270
      // Predicated region
      $region9: #{tpu_custom_call.1} parent=5 // pred_check
        _
      $region10: #{tpu_custom_call.1} parent=5 // pred_check_branch
        %273 = sbr.rel (%p270) target = $region12
      $region11: #{tpu_custom_call.1} parent=5 // pred_region
        %s274 = ssub.s32 %s19, 1
        // Predicated region
        $region13: #{tpu_custom_call.1} parent=11 // pred_check
          %p275 = pneg %p66
        $region14: #{tpu_custom_call.1} parent=11 // pred_check_branch
          %277 = sbr.rel (%p275) target = $region16
        $region15: #{tpu_custom_call.1} parent=11 // pred_region
          _
        $region16: #{tpu_custom_call.1} parent=11 // pred_fallthru
          _
        // Predicated region
        $region17: #{tpu_custom_call.1} parent=11 // pred_check
          %p278 = pneg %p87
        $region18: #{tpu_custom_call.1} parent=11 // pred_check_branch
          %280 = sbr.rel (%p278) target = $region20
        $region19: #{tpu_custom_call.1} parent=11 // pred_region
          _
        $region20: #{tpu_custom_call.1} parent=11 // pred_fallthru
          _
        // Predicated region
        $region21: #{tpu_custom_call.1} parent=11 // pred_check
          %p281 = pneg %p108
        $region22: #{tpu_custom_call.1} parent=11 // pred_check_branch
          %283 = sbr.rel (%p281) target = $region24
        $region23: #{tpu_custom_call.1} parent=11 // pred_region
          _
        $region24: #{tpu_custom_call.1} parent=11 // pred_fallthru
          _
        // Predicated region
        $region25: #{tpu_custom_call.1} parent=11 // pred_check
          %p284 = pneg %p129
        $region26: #{tpu_custom_call.1} parent=11 // pred_check_branch
          %286 = sbr.rel (%p284) target = $region28
        $region27: #{tpu_custom_call.1} parent=11 // pred_region
          _
        $region28: #{tpu_custom_call.1} parent=11 // pred_fallthru
          _
        // Predicated region
        $region29: #{tpu_custom_call.1} parent=11 // pred_check
          %p287 = pneg %p150
        $region30: #{tpu_custom_call.1} parent=11 // pred_check_branch
          %289 = sbr.rel (%p287) target = $region32
        $region31: #{tpu_custom_call.1} parent=11 // pred_region
          _
        $region32: #{tpu_custom_call.1} parent=11 // pred_fallthru
          _
        // Predicated region
        $region33: #{tpu_custom_call.1} parent=11 // pred_check
          %p290 = pneg %p171
        $region34: #{tpu_custom_call.1} parent=11 // pred_check_branch
          %292 = sbr.rel (%p290) target = $region36
        $region35: #{tpu_custom_call.1} parent=11 // pred_region
          _
        $region36: #{tpu_custom_call.1} parent=11 // pred_fallthru
          _
        // Predicated region
        $region37: #{tpu_custom_call.1} parent=11 // pred_check
          %p293 = pneg %p192
        $region38: #{tpu_custom_call.1} parent=11 // pred_check_branch
          %295 = sbr.rel (%p293) target = $region40
        $region39: #{tpu_custom_call.1} parent=11 // pred_region
          _
        $region40: #{tpu_custom_call.1} parent=11 // pred_fallthru
          _
        // Predicated region
        $region41: #{tpu_custom_call.1} parent=11 // pred_check
          %p296 = pneg %p213
        $region42: #{tpu_custom_call.1} parent=11 // pred_check_branch
          %298 = sbr.rel (%p296) target = $region44
        $region43: #{tpu_custom_call.1} parent=11 // pred_region
          _
        $region44: #{tpu_custom_call.1} parent=11 // pred_fallthru
          _
        // Predicated region
        $region45: #{tpu_custom_call.1} parent=11 // pred_check
          %p299 = pneg %p234
        $region46: #{tpu_custom_call.1} parent=11 // pred_check_branch
          %301 = sbr.rel (%p299) target = $region48
        $region47: #{tpu_custom_call.1} parent=11 // pred_region
          _
        $region48: #{tpu_custom_call.1} parent=11 // pred_fallthru
          _
      $region12: #{tpu_custom_call.1} parent=5 // pred_fallthru
        _
      %p302 = scmp.lt.s32.totalorder %s19, 2
      // Predicated region
      $region49: #{tpu_custom_call.1} parent=5 // pred_check
        %p303 = pneg %p302
      $region50: #{tpu_custom_call.1} parent=5 // pred_check_branch
        %305 = sbr.rel (%p303) target = $region52
      $region51: #{tpu_custom_call.1} parent=5 // pred_region
        // Predicated region
        $region53: #{tpu_custom_call.1} parent=51 // pred_check
          %p306 = pneg %p39
        $region54: #{tpu_custom_call.1} parent=51 // pred_check_branch
          %308 = sbr.rel (%p306) target = $region56
        $region55: #{tpu_custom_call.1} parent=51 // pred_region
          %p309 = scmp.lt.s32.totalorder %s19, 1
          %s310 = scalar_select %p309, %s19, 1
          %s311 = smul.addr %s310, 2
          %s312 = smul.addr %s311, 2
          %s313 = scalar_lea.vmem %s0, %s312
        $region56: #{tpu_custom_call.1} parent=51 // pred_fallthru
          _
      $region52: #{tpu_custom_call.1} parent=5 // pred_fallthru
        _
      %p314 = scmp.le.s32.totalorder 1, %s19
      %p315 = scmp.lt.s32.totalorder %s19, 3
      %p316 = pnand %p314, %p315
      %p317 = pneg %p316
      // Predicated region
      $region57: #{tpu_custom_call.1} parent=5 // pred_check
        _
      $region58: #{tpu_custom_call.1} parent=5 // pred_check_branch
        %319 = sbr.rel (%p316) target = $region60
      $region59: #{tpu_custom_call.1} parent=5 // pred_region
        %s320 = ssub.s32 %s19, 1
        %p321 = scmp.lt.s32.totalorder %s24, 1
        %s322 = scalar_select %p321, %s24, 1
        %s323 = smul.addr %s322, 2
        %s324 = smul.addr %s323, 2
        %s325 = scalar_lea.vmem %s0, %s324
        %p326 = pneg %p45
        %p327 = pneg %p42
        %p328 = pneg %p66
        %p329 = pneg %p63
        %p330 = pneg %p87
        %p331 = pneg %p84
        %p332 = pneg %p108
        %p333 = pneg %p105
        %p334 = pneg %p129
        %p335 = pneg %p126
        %p336 = pneg %p150
        %p337 = pneg %p147
        %p338 = pneg %p171
        %p339 = pneg %p168
        %p340 = pneg %p192
        %p341 = pneg %p189
        %p342 = pneg %p213
        %p343 = pneg %p210
        %p344 = pneg %p234
        %p345 = pneg %p231
        %p346 = pneg %p260
        %p347 = pneg %p257
        %s348 = sand.u32 %s247, 1
        %s349 = scalar_lea.sflag [#allocation8], %s348
        %s350 = sand.u32 %s247, 1
        %s351 = smul.addr %s350, 8
        %s352 = scalar_lea.vmem [#allocation7], %s351
        %p353 = scmp.lt.s32.totalorder %s24, 1
        %s354 = scalar_select %p353, %s24, 1
        %s355 = smul.addr %s354, 2
        %s356 = smul.addr %s355, 2
        %s357 = scalar_lea.vmem %s0, %s356
        %359 = vst [vmem:[#allocation2] sm:$0xf] 0.0
        %360 = vst [vmem:[#allocation2 + $0xc] sm:$0xf] 0.0
        %361 = vst [vmem:[#allocation3] sm:$0xf] 0.0
        %vm362 = vcmask 1043968
        %vm363 = vcmask 523268
        %vm364 = vmor %vm363, %vm362
        %365 = vst.msk [vmem:[#allocation3 + $0x4] sm:$0xff] %vm364, 0.0
        %366 = vst [vmem:[#allocation4] sm:$0xfc] 0
        %367 = vst [vmem:[#allocation4 + $0x8] sm:$0xfc] 0
        %vm368 = vcmask 523266
        %369 = vst.msk [vmem:[#allocation5] sm:$0xfc] %vm368, 0
        %370 = vst [vmem:[#allocation4 + $0x10] sm:$0xfc] 0
        %371 = vst [vmem:[#allocation4 + $0x18] sm:$0xfc] 0
        %372 = vst.msk [vmem:[#allocation5 + $0x8] sm:$0xfc] %vm368, 0
        %373 = vst [vmem:[#allocation4 + $0x20] sm:$0xfc] 0
        %374 = vst [vmem:[#allocation4 + $0x28] sm:$0xfc] 0
        %375 = vst.msk [vmem:[#allocation5 + $0x10] sm:$0xfc] %vm368, 0
        %376 = vst [vmem:[#allocation4 + $0x30] sm:$0xfc] 0
        %377 = vst [vmem:[#allocation4 + $0x38] sm:$0xfc] 0
        %378 = vst.msk [vmem:[#allocation5 + $0x18] sm:$0xfc] %vm368, 0
        %379 = vst [vmem:[#allocation4 + $0x40] sm:$0xfc] 0
        %380 = vst [vmem:[#allocation4 + $0x48] sm:$0xfc] 0
        %381 = vst.msk [vmem:[#allocation5 + $0x20] sm:$0xfc] %vm368, 0
        %382 = vst [vmem:[#allocation4 + $0x50] sm:$0xfc] 0
        %383 = vst [vmem:[#allocation4 + $0x58] sm:$0xfc] 0
        %384 = vst.msk [vmem:[#allocation5 + $0x28] sm:$0xfc] %vm368, 0
        %385 = vst [vmem:[#allocation4 + $0x60] sm:$0xfc] 0
        %386 = vst [vmem:[#allocation4 + $0x68] sm:$0xfc] 0
        %387 = vst.msk [vmem:[#allocation5 + $0x30] sm:$0xfc] %vm368, 0
        %388 = vst [vmem:[#allocation4 + $0x70] sm:$0xfc] 0
        %389 = vst [vmem:[#allocation4 + $0x78] sm:$0xfc] 0
        %390 = vst.msk [vmem:[#allocation5 + $0x38] sm:$0xfc] %vm368, 0
        %391 = vst [vmem:[#allocation4 + $0x80] sm:$0xfc] 0
        %392 = vst [vmem:[#allocation4 + $0x88] sm:$0xfc] 0
        %393 = vst.msk [vmem:[#allocation5 + $0x40] sm:$0xfc] %vm368, 0
        %v394 = vld [vmem:[%s1] sm:$0xf]
        %v395 = vld [vmem:[%s2] sm:$0xf]
        %v396 = vld [vmem:[%s3] sm:$0xff]
        %v397 = vld [vmem:[%s4] sm:$0xff]
        %v398 = vld [vmem:[%s5] sm:$0xff]
        %v399 = vld [vmem:[%s6] sm:$0xff]
        %v400 = vld [vmem:[%s357] sm:$0xf]
        %v401 = vunpack.c.l.bf16 %v400
        %402 = vst [vmem:[#allocation2 + $0x4] sm:$0xff] %v401
        %v403 = vld [vmem:[#allocation2] sm:$0xff]
        %v404 = vld [vmem:[#allocation2 + $0x8] sm:$0xf]
        %v405 = vld [vmem:[%s7] ss:$8 sm:$0x3]
        %v407 = vlaneseq
        %v408 = vshrl.u32 %v407, 7
        %v409 = vsub.s32 0, %v408
        %v410 = vrot.slane %v405, %v409
        %v411 = vlaneseq
        %v412 = vshrl.u32 %v411, 7
        %v413 = vsub.s32 1, %v412
        %v414 = vrot.slane %v405, %v413
        %v415 = vcombine.low %v410, %v414
        %416 = vrot.lane.b32.xlu0 %v415, 111
        %v417 = vpop.permute.xlu0 %416
        %v418 = vrot.slane %v417, 4
        %vm419 = vcmask 908288
        %v420 = vsel %vm419, %v418, %v417
        %v423 = vmul.f32 %v403, %v420
        %v424 = vmul.f32 %v404, %v418
        %v426 = vcombine.high %v423, %v423
        %v428 = vpack.c.bf16 %v423, %v423
        %v429 = vpack.c.bf16 %v426, %v426
        %v430 = vpack.c.bf16 %v424, %v424
        %434 = vrot.lane.b32.xlu0 %v428, 17
        %v435 = vpop.permute.xlu0 %434
        %436 = vrot.lane.b32.xlu0 %v429, 17
        %v437 = vpop.permute.xlu0 %436
        %438 = vrot.lane.b32.xlu0 %v430, 17
        %v439 = vpop.permute.xlu0 %438
        %vm440 = vcmask 138240
        %v441 = vsel %vm440, %v435, %v437
        %v442 = vsel %vm440, %v437, %v439
        %445 = vst [vmem:[#allocation4] sm:$0x3] %v441
        %446 = vst [vmem:[#allocation4 + $0x8] sm:$0x3] %v442
        %v447 = vld [vmem:[#allocation2] sm:$0xff]
        %v448 = vld [vmem:[#allocation2 + $0x8] sm:$0xf]
        %s449 = scalar_lea.vmem %s7, 1
        %v450 = vld [vmem:[%s449] ss:$8 sm:$0x3]
        %v452 = vlaneseq
        %v453 = vshrl.u32 %v452, 7
        %v454 = vsub.s32 0, %v453
        %v455 = vrot.slane %v450, %v454
        %v456 = vlaneseq
        %v457 = vshrl.u32 %v456, 7
        %v458 = vsub.s32 1, %v457
        %v459 = vrot.slane %v450, %v458
        %v460 = vcombine.low %v455, %v459
        %461 = vrot.lane.b32.xlu0 %v460, 112
        %v462 = vpop.permute.xlu0 %461
        %v463 = vrot.slane %v462, 4
        %vm464 = vcmask 916480
        %v465 = vsel %vm464, %v463, %v462
        %v468 = vmul.f32 %v447, %v465
        %v469 = vmul.f32 %v448, %v463
        %v471 = vcombine.high %v468, %v468
        %v473 = vpack.c.bf16 %v468, %v468
        %v474 = vpack.c.bf16 %v471, %v471
        %v475 = vpack.c.bf16 %v469, %v469
        %479 = vrot.lane.b32.xlu0 %v473, 16
        %v480 = vpop.permute.xlu0 %479
        %481 = vrot.lane.b32.xlu0 %v474, 16
        %v482 = vpop.permute.xlu0 %481
        %483 = vrot.lane.b32.xlu0 %v475, 16
        %v484 = vpop.permute.xlu0 %483
        %vm485 = vcmask 130048
        %v486 = vsel %vm485, %v480, %v482
        %v487 = vsel %vm485, %v482, %v484
        %490 = vst [vmem:[#allocation4 + $0x10] sm:$0x3] %v486
        %491 = vst [vmem:[#allocation4 + $0x18] sm:$0x3] %v487
        %v492 = vld [vmem:[#allocation2] sm:$0xff]
        %v493 = vld [vmem:[#allocation2 + $0x8] sm:$0xf]
        %s494 = scalar_lea.vmem %s7, 2
        %v495 = vld [vmem:[%s494] ss:$8 sm:$0x3]
        %v497 = vlaneseq
        %v498 = vshrl.u32 %v497, 7
        %v499 = vsub.s32 0, %v498
        %v500 = vrot.slane %v495, %v499
        %v501 = vlaneseq
        %v502 = vshrl.u32 %v501, 7
        %v503 = vsub.s32 1, %v502
        %v504 = vrot.slane %v495, %v503
        %v505 = vcombine.low %v500, %v504
        %506 = vrot.lane.b32.xlu0 %v505, 113
        %v507 = vpop.permute.xlu0 %506
        %v508 = vrot.slane %v507, 4
        %vm509 = vcmask 924672
        %v510 = vsel %vm509, %v508, %v507
        %v513 = vmul.f32 %v492, %v510
        %v514 = vmul.f32 %v493, %v508
        %v516 = vcombine.high %v513, %v513
        %v518 = vpack.c.bf16 %v513, %v513
        %v519 = vpack.c.bf16 %v516, %v516
        %v520 = vpack.c.bf16 %v514, %v514
        %524 = vrot.lane.b32.xlu0 %v518, 15
        %v525 = vpop.permute.xlu0 %524
        %526 = vrot.lane.b32.xlu0 %v519, 15
        %v527 = vpop.permute.xlu0 %526
        %528 = vrot.lane.b32.xlu0 %v520, 15
        %v529 = vpop.permute.xlu0 %528
        %vm530 = vcmask 121856
        %v531 = vsel %vm530, %v525, %v527
        %v532 = vsel %vm530, %v527, %v529
        %535 = vst [vmem:[#allocation4 + $0x20] sm:$0x3] %v531
        %536 = vst [vmem:[#allocation4 + $0x28] sm:$0x3] %v532
        %v537 = vld [vmem:[#allocation2] sm:$0xff]
        %v538 = vld [vmem:[#allocation2 + $0x8] sm:$0xf]
        %s539 = scalar_lea.vmem %s7, 3
        %v540 = vld [vmem:[%s539] ss:$8 sm:$0x3]
        %v542 = vlaneseq
        %v543 = vshrl.u32 %v542, 7
        %v544 = vsub.s32 0, %v543
        %v545 = vrot.slane %v540, %v544
        %v546 = vlaneseq
        %v547 = vshrl.u32 %v546, 7
        %v548 = vsub.s32 1, %v547
        %v549 = vrot.slane %v540, %v548
        %v550 = vcombine.low %v545, %v549
        %551 = vrot.lane.b32.xlu0 %v550, 127
        %v552 = vpop.permute.xlu0 %551
        %v553 = vrot.slane %v552, 4
        %vm554 = vcmask 1039360
        %v555 = vsel %vm554, %v553, %v552
        %v558 = vmul.f32 %v537, %v555
        %v559 = vmul.f32 %v538, %v553
        %v561 = vcombine.high %v558, %v558
        %v563 = vpack.c.bf16 %v558, %v558
        %v564 = vpack.c.bf16 %v561, %v561
        %v565 = vpack.c.bf16 %v559, %v559
        %569 = vrot.lane.b32.xlu0 %v563, 1
        %v570 = vpop.permute.xlu0 %569
        %571 = vrot.lane.b32.xlu0 %v564, 1
        %v572 = vpop.permute.xlu0 %571
        %573 = vrot.lane.b32.xlu0 %v565, 1
        %v574 = vpop.permute.xlu0 %573
        %vm575 = vcmask 7168
        %v576 = vsel %vm575, %v570, %v572
        %v577 = vsel %vm575, %v572, %v574
        %580 = vst [vmem:[#allocation4 + $0x30] sm:$0x3] %v576
        %581 = vst [vmem:[#allocation4 + $0x38] sm:$0x3] %v577
        %v582 = vld [vmem:[#allocation2 + $0x4] sm:$0xff]
        %s583 = scalar_lea.vmem %s7, 4
        %v584 = vld [vmem:[%s583] ss:$8 sm:$0x3]
        %v586 = vlaneseq
        %v587 = vshrl.u32 %v586, 7
        %v588 = vsub.s32 0, %v587
        %v589 = vrot.slane %v584, %v588
        %v590 = vlaneseq
        %v591 = vshrl.u32 %v590, 7
        %v592 = vsub.s32 1, %v591
        %v593 = vrot.slane %v584, %v592
        %v594 = vcombine.low %v589, %v593
        %v596 = vmul.f32 %v582, %v594
        %v598 = vcombine.high %v596, %v596
        %v600 = vpack.c.bf16 %v596, %v596
        %v601 = vpack.c.bf16 %v598, %v598
        %602 = vst [vmem:[#allocation4 + $0x40] sm:$0x3] %v600
        %603 = vst [vmem:[#allocation4 + $0x48] sm:$0x3] %v601
        %v604 = vld [vmem:[#allocation2 + $0x4] sm:$0xff]
        %v605 = vld [vmem:[#allocation2 + $0xc] sm:$0xf]
        %s606 = scalar_lea.vmem %s7, 5
        %v607 = vld [vmem:[%s606] ss:$8 sm:$0x3]
        %v609 = vlaneseq
        %v610 = vshrl.u32 %v609, 7
        %v611 = vsub.s32 0, %v610
        %v612 = vrot.slane %v607, %v611
        %v613 = vlaneseq
        %v614 = vshrl.u32 %v613, 7
        %v615 = vsub.s32 1, %v614
        %v616 = vrot.slane %v607, %v615
        %v617 = vcombine.low %v612, %v616
        %618 = vrot.lane.b32.xlu0 %v617, 1
        %v619 = vpop.permute.xlu0 %618
        %v620 = vrot.slane %v619, 4
        %vm621 = vcmask 7168
        %v622 = vsel %vm621, %v620, %v619
        %v625 = vmul.f32 %v604, %v622
        %v626 = vmul.f32 %v605, %v620
        %v628 = vcombine.high %v625, %v625
        %v630 = vpack.c.bf16 %v625, %v625
        %v631 = vpack.c.bf16 %v628, %v628
        %v632 = vpack.c.bf16 %v626, %v626
        %636 = vrot.lane.b32.xlu0 %v630, 127
        %v637 = vpop.permute.xlu0 %636
        %638 = vrot.lane.b32.xlu0 %v631, 127
        %v639 = vpop.permute.xlu0 %638
        %640 = vrot.lane.b32.xlu0 %v632, 127
        %v641 = vpop.permute.xlu0 %640
        %vm642 = vcmask 1039360
        %v643 = vsel %vm642, %v637, %v639
        %v644 = vsel %vm642, %v639, %v641
        %647 = vst [vmem:[#allocation4 + $0x50] sm:$0x3] %v643
        %648 = vst [vmem:[#allocation4 + $0x58] sm:$0x3] %v644
        %v649 = vld [vmem:[#allocation2 + $0x4] sm:$0xff]
        %v650 = vld [vmem:[#allocation2 + $0xc] sm:$0xf]
        %s651 = scalar_lea.vmem %s7, 6
        %v652 = vld [vmem:[%s651] ss:$8 sm:$0x3]
        %v654 = vlaneseq
        %v655 = vshrl.u32 %v654, 7
        %v656 = vsub.s32 0, %v655
        %v657 = vrot.slane %v652, %v656
        %v658 = vlaneseq
        %v659 = vshrl.u32 %v658, 7
        %v660 = vsub.s32 1, %v659
        %v661 = vrot.slane %v652, %v660
        %v662 = vcombine.low %v657, %v661
        %663 = vrot.lane.b32.xlu0 %v662, 15
        %v664 = vpop.permute.xlu0 %663
        %v665 = vrot.slane %v664, 4
        %vm666 = vcmask 121856
        %v667 = vsel %vm666, %v665, %v664
        %v670 = vmul.f32 %v649, %v667
        %v671 = vmul.f32 %v650, %v665
        %v673 = vcombine.high %v670, %v670
        %v675 = vpack.c.bf16 %v670, %v670
        %v676 = vpack.c.bf16 %v673, %v673
        %v677 = vpack.c.bf16 %v671, %v671
        %681 = vrot.lane.b32.xlu0 %v675, 113
        %v682 = vpop.permute.xlu0 %681
        %683 = vrot.lane.b32.xlu0 %v676, 113
        %v684 = vpop.permute.xlu0 %683
        %685 = vrot.lane.b32.xlu0 %v677, 113
        %v686 = vpop.permute.xlu0 %685
        %vm687 = vcmask 924672
        %v688 = vsel %vm687, %v682, %v684
        %v689 = vsel %vm687, %v684, %v686
        %692 = vst [vmem:[#allocation4 + $0x60] sm:$0x3] %v688
        %693 = vst [vmem:[#allocation4 + $0x68] sm:$0x3] %v689
        %v694 = vld [vmem:[#allocation2 + $0x4] sm:$0xff]
        %v695 = vld [vmem:[#allocation2 + $0xc] sm:$0xf]
        %s696 = scalar_lea.vmem %s7, 7
        %v697 = vld [vmem:[%s696] ss:$8 sm:$0x3]
        %v699 = vlaneseq
        %v700 = vshrl.u32 %v699, 7
        %v701 = vsub.s32 0, %v700
        %v702 = vrot.slane %v697, %v701
        %v703 = vlaneseq
        %v704 = vshrl.u32 %v703, 7
        %v705 = vsub.s32 1, %v704
        %v706 = vrot.slane %v697, %v705
        %v707 = vcombine.low %v702, %v706
        %708 = vrot.lane.b32.xlu0 %v707, 16
        %v709 = vpop.permute.xlu0 %708
        %v710 = vrot.slane %v709, 4
        %vm711 = vcmask 130048
        %v712 = vsel %vm711, %v710, %v709
        %v715 = vmul.f32 %v694, %v712
        %v716 = vmul.f32 %v695, %v710
        %v718 = vcombine.high %v715, %v715
        %v720 = vpack.c.bf16 %v715, %v715
        %v721 = vpack.c.bf16 %v718, %v718
        %v722 = vpack.c.bf16 %v716, %v716
        %726 = vrot.lane.b32.xlu0 %v720, 112
        %v727 = vpop.permute.xlu0 %726
        %728 = vrot.lane.b32.xlu0 %v721, 112
        %v729 = vpop.permute.xlu0 %728
        %730 = vrot.lane.b32.xlu0 %v722, 112
        %v731 = vpop.permute.xlu0 %730
        %vm732 = vcmask 916480
        %v733 = vsel %vm732, %v727, %v729
        %v734 = vsel %vm732, %v729, %v731
        %737 = vst [vmem:[#allocation4 + $0x70] sm:$0x3] %v733
        %738 = vst [vmem:[#allocation4 + $0x78] sm:$0x3] %v734
        %v739 = vld [vmem:[#allocation2 + $0x4] sm:$0xff]
        %v740 = vld [vmem:[#allocation2 + $0xc] sm:$0xf]
        %s741 = scalar_lea.vmem %s7, 16
        %v742 = vld [vmem:[%s741] ss:$8 sm:$0x3]
        %v744 = vlaneseq
        %v745 = vshrl.u32 %v744, 7
        %v746 = vsub.s32 0, %v745
        %v747 = vrot.slane %v742, %v746
        %v748 = vlaneseq
        %v749 = vshrl.u32 %v748, 7
        %v750 = vsub.s32 1, %v749
        %v751 = vrot.slane %v742, %v750
        %v752 = vcombine.low %v747, %v751
        %753 = vrot.lane.b32.xlu0 %v752, 17
        %v754 = vpop.permute.xlu0 %753
        %v755 = vrot.slane %v754, 4
        %vm756 = vcmask 138240
        %v757 = vsel %vm756, %v755, %v754
        %v760 = vmul.f32 %v739, %v757
        %v761 = vmul.f32 %v740, %v755
        %v763 = vcombine.high %v760, %v760
        %v765 = vpack.c.bf16 %v760, %v760
        %v766 = vpack.c.bf16 %v763, %v763
        %v767 = vpack.c.bf16 %v761, %v761
        %771 = vrot.lane.b32.xlu0 %v765, 111
        %v772 = vpop.permute.xlu0 %771
        %773 = vrot.lane.b32.xlu0 %v766, 111
        %v774 = vpop.permute.xlu0 %773
        %775 = vrot.lane.b32.xlu0 %v767, 111
        %v776 = vpop.permute.xlu0 %775
        %vm777 = vcmask 908288
        %v778 = vsel %vm777, %v772, %v774
        %v779 = vsel %vm777, %v774, %v776
        %782 = vst [vmem:[#allocation4 + $0x80] sm:$0x3] %v778
        %783 = vst [vmem:[#allocation4 + $0x88] sm:$0x3] %v779
        %v784 = vld [vmem:[#allocation4] sm:$0xff]
        %v785 = vld [vmem:[#allocation4 + $0x8] sm:$0xff]
        %v786 = vld [vmem:[#allocation4 + $0x10] sm:$0xff]
        %v787 = vld [vmem:[#allocation4 + $0x18] sm:$0xff]
        %v788 = vld [vmem:[#allocation4 + $0x20] sm:$0xff]
        %v789 = vld [vmem:[#allocation4 + $0x28] sm:$0xff]
        %v790 = vld [vmem:[#allocation4 + $0x30] sm:$0xff]
        %v791 = vld [vmem:[#allocation4 + $0x38] sm:$0xff]
        %v792 = vld [vmem:[#allocation4 + $0x40] sm:$0xff]
        %v793 = vld [vmem:[#allocation4 + $0x48] sm:$0xff]
        %v794 = vld [vmem:[#allocation4 + $0x50] sm:$0xff]
        %v795 = vld [vmem:[#allocation4 + $0x58] sm:$0xff]
        %v796 = vld [vmem:[#allocation4 + $0x60] sm:$0xff]
        %v797 = vld [vmem:[#allocation4 + $0x68] sm:$0xff]
        %v798 = vld [vmem:[#allocation4 + $0x70] sm:$0xff]
        %v799 = vld [vmem:[#allocation4 + $0x78] sm:$0xff]
        %v800 = vld [vmem:[#allocation4 + $0x80] sm:$0xff]
        %v801 = vld [vmem:[#allocation4 + $0x88] sm:$0xff]
        %803 = vset.pattern.permute.xlu0 0
        %804 = vperm.xlu0 %803, %v395
        %v805 = vpop.permute.xlu0 %804
        %v809 = vunpack.c.l.s4 1983009808
        %v810 = vunpack.c.0.s8 %v809
        %v811 = vlaneseq
        %v812 = vshrl.u32 %v811, 7
        %v813 = vsub.s32 %v810, %v812
        %v814 = vrot.slane %v394, %v813
        %v815 = vcombine.high %v814, %v814
        %v818 = vsel %vm711, %v815, 0
        %820 = vmatprep.subr.bf16.mxu0 %v785
        %821 = vmatpush1.bf16.msra.mxu0 %v784
        %822 = vmatprep.subr.bf16.mxu0 %v787
        %823 = vmatpush1.bf16.msra.mxu0 %v786
        %824 = vmatprep.subr.bf16.mxu0 %v789
        %825 = vmatpush1.bf16.msra.mxu0 %v788
        %826 = vmatprep.subr.bf16.mxu0 %v791
        %827 = vmatpush1.bf16.msra.mxu0 %v790
        %828 = vmatprep.subr.bf16.mxu0 %v793
        %829 = vmatpush1.bf16.msra.mxu0 %v792
        %830 = vmatprep.subr.bf16.mxu0 %v795
        %831 = vmatpush1.bf16.msra.mxu0 %v794
        %832 = vmatprep.subr.bf16.mxu0 %v797
        %833 = vmatpush1.bf16.msra.mxu0 %v796
        %834 = vmatprep.subr.bf16.mxu0 %v799
        %835 = vmatpush1.bf16.msra.mxu0 %v798
        %836 = vmatprep.subr.bf16.mxu0 %v801
        %837 = vmatpush1.bf16.msra.mxu0 %v800
        %838 = vmatprep.subr.bf16.mxu0 0
        %839 = vmatpush1.bf16.msra.mxu0 0
        %840 = vmatprep.subr.bf16.mxu0 0
        %841 = vmatpush1.bf16.msra.mxu0 0
        %842 = vmatprep.subr.bf16.mxu0 0
        %843 = vmatpush1.bf16.msra.mxu0 0
        %844 = vmatprep.subr.bf16.mxu0 0
        %845 = vmatpush1.bf16.msra.mxu0 0
        %846 = vmatprep.subr.bf16.mxu0 0
        %847 = vmatpush1.bf16.msra.mxu0 0
        %848 = vmatprep.subr.bf16.mxu0 0
        %849 = vmatpush1.bf16.msra.mxu0 0
        %850 = vmatprep.subr.bf16.mxu0 0
        %851 = vmatpush1.bf16.msra.mxu0 0
        %852 = vmatprep.mubr.bf16.mxu0 %v818
        %853 = vmatmul.mubr.bf16.gmra.mrb[0].mxu0 %v814
        %v854 = vpop.f32.mrb[0].mxu0
        %v855 = vadd.f32 %v805, %v854
        %v856 = vpop.f32.mrb[0].mxu0
        %v857 = vadd.f32 %v805, %v856
        %v858 = vpop.f32.mrb[0].mxu0
        %v859 = vpop.f32.mrb[0].mxu0
        %860 = vdwg.mxu0
        %vm861 = vcmp.gt.f32.partialorder %v855, 0.0
        %vm862 = vcmp.gt.f32.partialorder %v857, 0.0
        %v863 = vmul.f32 %v855, 0.2
        %v864 = vmul.f32 %v857, 0.2
        %v865 = vsel %vm861, %v855, %v863
        %v866 = vsel %vm862, %v857, %v864
        %v869 = vcombine.low %v865, %v866
        %871 = vst [vmem:[#allocation2 + $0x4] sm:$0xff] %v869
        %v872 = vld [vmem:[#allocation2] sm:$0xff]
        %v873 = vld [vmem:[#allocation2 + $0x8] sm:$0xf]
        %v874 = vld [vmem:[%s7] ss:$8 sm:$0x3]
        %v876 = vlaneseq
        %v877 = vshrl.u32 %v876, 7
        %v878 = vsub.s32 0, %v877
        %v879 = vrot.slane %v874, %v878
        %v880 = vlaneseq
        %v881 = vshrl.u32 %v880, 7
        %v882 = vsub.s32 1, %v881
        %v883 = vrot.slane %v874, %v882
        %v884 = vcombine.low %v879, %v883
        %885 = vrot.lane.b32.xlu0 %v884, 111
        %v886 = vpop.permute.xlu0 %885
        %v887 = vrot.slane %v886, 4
        %v888 = vsel %vm419, %v887, %v886
        %v891 = vmul.f32 %v872, %v888
        %v892 = vmul.f32 %v873, %v887
        %v894 = vcombine.high %v891, %v891
        %v896 = vpack.c.bf16 %v891, %v891
        %v897 = vpack.c.bf16 %v894, %v894
        %v898 = vpack.c.bf16 %v892, %v892
        %902 = vrot.lane.b32.xlu0 %v896, 17
        %v903 = vpop.permute.xlu0 %902
        %904 = vrot.lane.b32.xlu0 %v897, 17
        %v905 = vpop.permute.xlu0 %904
        %906 = vrot.lane.b32.xlu0 %v898, 17
        %v907 = vpop.permute.xlu0 %906
        %v908 = vsel %vm440, %v903, %v905
        %v909 = vsel %vm440, %v905, %v907
        %912 = vst [vmem:[#allocation4] sm:$0x3] %v908
        %913 = vst [vmem:[#allocation4 + $0x8] sm:$0x3] %v909
        %v914 = vld [vmem:[#allocation2] sm:$0xff]
        %v915 = vld [vmem:[#allocation2 + $0x8] sm:$0xf]
        %v916 = vld [vmem:[%s449] ss:$8 sm:$0x3]
        %v918 = vlaneseq
        %v919 = vshrl.u32 %v918, 7
        %v920 = vsub.s32 0, %v919
        %v921 = vrot.slane %v916, %v920
        %v922 = vlaneseq
        %v923 = vshrl.u32 %v922, 7
        %v924 = vsub.s32 1, %v923
        %v925 = vrot.slane %v916, %v924
        %v926 = vcombine.low %v921, %v925
        %927 = vrot.lane.b32.xlu0 %v926, 112
        %v928 = vpop.permute.xlu0 %927
        %v929 = vrot.slane %v928, 4
        %v930 = vsel %vm464, %v929, %v928
        %v933 = vmul.f32 %v914, %v930
        %v934 = vmul.f32 %v915, %v929
        %v936 = vcombine.high %v933, %v933
        %v938 = vpack.c.bf16 %v933, %v933
        %v939 = vpack.c.bf16 %v936, %v936
        %v940 = vpack.c.bf16 %v934, %v934
        %944 = vrot.lane.b32.xlu0 %v938, 16
        %v945 = vpop.permute.xlu0 %944
        %946 = vrot.lane.b32.xlu0 %v939, 16
        %v947 = vpop.permute.xlu0 %946
        %948 = vrot.lane.b32.xlu0 %v940, 16
        %v949 = vpop.permute.xlu0 %948
        %v950 = vsel %vm485, %v945, %v947
        %v951 = vsel %vm485, %v947, %v949
        %954 = vst [vmem:[#allocation4 + $0x10] sm:$0x3] %v950
        %955 = vst [vmem:[#allocation4 + $0x18] sm:$0x3] %v951
        %v956 = vld [vmem:[#allocation2] sm:$0xff]
        %v957 = vld [vmem:[#allocation2 + $0x8] sm:$0xf]
        %v958 = vld [vmem:[%s494] ss:$8 sm:$0x3]
        %v960 = vlaneseq
        %v961 = vshrl.u32 %v960, 7
        %v962 = vsub.s32 0, %v961
        %v963 = vrot.slane %v958, %v962
        %v964 = vlaneseq
        %v965 = vshrl.u32 %v964, 7
        %v966 = vsub.s32 1, %v965
        %v967 = vrot.slane %v958, %v966
        %v968 = vcombine.low %v963, %v967
        %969 = vrot.lane.b32.xlu0 %v968, 113
        %v970 = vpop.permute.xlu0 %969
        %v971 = vrot.slane %v970, 4
        %v972 = vsel %vm509, %v971, %v970
        %v975 = vmul.f32 %v956, %v972
        %v976 = vmul.f32 %v957, %v971
        %v978 = vcombine.high %v975, %v975
        %v980 = vpack.c.bf16 %v975, %v975
        %v981 = vpack.c.bf16 %v978, %v978
        %v982 = vpack.c.bf16 %v976, %v976
        %986 = vrot.lane.b32.xlu0 %v980, 15
        %v987 = vpop.permute.xlu0 %986
        %988 = vrot.lane.b32.xlu0 %v981, 15
        %v989 = vpop.permute.xlu0 %988
        %990 = vrot.lane.b32.xlu0 %v982, 15
        %v991 = vpop.permute.xlu0 %990
        %v992 = vsel %vm530, %v987, %v989
        %v993 = vsel %vm530, %v989, %v991
        %996 = vst [vmem:[#allocation4 + $0x20] sm:$0x3] %v992
        %997 = vst [vmem:[#allocation4 + $0x28] sm:$0x3] %v993
        %v998 = vld [vmem:[#allocation2] sm:$0xff]
        %v999 = vld [vmem:[#allocation2 + $0x8] sm:$0xf]
        %v1000 = vld [vmem:[%s539] ss:$8 sm:$0x3]
        %v1002 = vlaneseq
        %v1003 = vshrl.u32 %v1002, 7
        %v1004 = vsub.s32 0, %v1003
        %v1005 = vrot.slane %v1000, %v1004
        %v1006 = vlaneseq
        %v1007 = vshrl.u32 %v1006, 7
        %v1008 = vsub.s32 1, %v1007
        %v1009 = vrot.slane %v1000, %v1008
        %v1010 = vcombine.low %v1005, %v1009
        %1011 = vrot.lane.b32.xlu0 %v1010, 127
        %v1012 = vpop.permute.xlu0 %1011
        %v1013 = vrot.slane %v1012, 4
        %v1014 = vsel %vm554, %v1013, %v1012
        %v1017 = vmul.f32 %v998, %v1014
        %v1018 = vmul.f32 %v999, %v1013
        %v1020 = vcombine.high %v1017, %v1017
        %v1022 = vpack.c.bf16 %v1017, %v1017
        %v1023 = vpack.c.bf16 %v1020, %v1020
        %v1024 = vpack.c.bf16 %v1018, %v1018
        %1028 = vrot.lane.b32.xlu0 %v1022, 1
        %v1029 = vpop.permute.xlu0 %1028
        %1030 = vrot.lane.b32.xlu0 %v1023, 1
        %v1031 = vpop.permute.xlu0 %1030
        %1032 = vrot.lane.b32.xlu0 %v1024, 1
        %v1033 = vpop.permute.xlu0 %1032
        %v1034 = vsel %vm575, %v1029, %v1031
        %v1035 = vsel %vm575, %v1031, %v1033
        %1038 = vst [vmem:[#allocation4 + $0x30] sm:$0x3] %v1034
        %1039 = vst [vmem:[#allocation4 + $0x38] sm:$0x3] %v1035
        %v1040 = vld [vmem:[#allocation2 + $0x4] sm:$0xff]
        %v1041 = vld [vmem:[%s583] ss:$8 sm:$0x3]
        %v1043 = vlaneseq
        %v1044 = vshrl.u32 %v1043, 7
        %v1045 = vsub.s32 0, %v1044
        %v1046 = vrot.slane %v1041, %v1045
        %v1047 = vlaneseq
        %v1048 = vshrl.u32 %v1047, 7
        %v1049 = vsub.s32 1, %v1048
        %v1050 = vrot.slane %v1041, %v1049
        %v1051 = vcombine.low %v1046, %v1050
        %v1053 = vmul.f32 %v1040, %v1051
        %v1055 = vcombine.high %v1053, %v1053
        %v1057 = vpack.c.bf16 %v1053, %v1053
        %v1058 = vpack.c.bf16 %v1055, %v1055
        %1059 = vst [vmem:[#allocation4 + $0x40] sm:$0x3] %v1057
        %1060 = vst [vmem:[#allocation4 + $0x48] sm:$0x3] %v1058
        %v1061 = vld [vmem:[#allocation2 + $0x4] sm:$0xff]
        %v1062 = vld [vmem:[#allocation2 + $0xc] sm:$0xf]
        %v1063 = vld [vmem:[%s606] ss:$8 sm:$0x3]
        %v1065 = vlaneseq
        %v1066 = vshrl.u32 %v1065, 7
        %v1067 = vsub.s32 0, %v1066
        %v1068 = vrot.slane %v1063, %v1067
        %v1069 = vlaneseq
        %v1070 = vshrl.u32 %v1069, 7
        %v1071 = vsub.s32 1, %v1070
        %v1072 = vrot.slane %v1063, %v1071
        %v1073 = vcombine.low %v1068, %v1072
        %1074 = vrot.lane.b32.xlu0 %v1073, 1
        %v1075 = vpop.permute.xlu0 %1074
        %v1076 = vrot.slane %v1075, 4
        %v1077 = vsel %vm621, %v1076, %v1075
        %v1080 = vmul.f32 %v1061, %v1077
        %v1081 = vmul.f32 %v1062, %v1076
        %v1083 = vcombine.high %v1080, %v1080
        %v1085 = vpack.c.bf16 %v1080, %v1080
        %v1086 = vpack.c.bf16 %v1083, %v1083
        %v1087 = vpack.c.bf16 %v1081, %v1081
        %1091 = vrot.lane.b32.xlu0 %v1085, 127
        %v1092 = vpop.permute.xlu0 %1091
        %1093 = vrot.lane.b32.xlu0 %v1086, 127
        %v1094 = vpop.permute.xlu0 %1093
        %1095 = vrot.lane.b32.xlu0 %v1087, 127
        %v1096 = vpop.permute.xlu0 %1095
        %v1097 = vsel %vm642, %v1092, %v1094
        %v1098 = vsel %vm642, %v1094, %v1096
        %1101 = vst [vmem:[#allocation4 + $0x50] sm:$0x3] %v1097
        %1102 = vst [vmem:[#allocation4 + $0x58] sm:$0x3] %v1098
        %v1103 = vld [vmem:[#allocation2 + $0x4] sm:$0xff]
        %v1104 = vld [vmem:[#allocation2 + $0xc] sm:$0xf]
        %v1105 = vld [vmem:[%s651] ss:$8 sm:$0x3]
        %v1107 = vlaneseq
        %v1108 = vshrl.u32 %v1107, 7
        %v1109 = vsub.s32 0, %v1108
        %v1110 = vrot.slane %v1105, %v1109
        %v1111 = vlaneseq
        %v1112 = vshrl.u32 %v1111, 7
        %v1113 = vsub.s32 1, %v1112
        %v1114 = vrot.slane %v1105, %v1113
        %v1115 = vcombine.low %v1110, %v1114
        %1116 = vrot.lane.b32.xlu0 %v1115, 15
        %v1117 = vpop.permute.xlu0 %1116
        %v1118 = vrot.slane %v1117, 4
        %v1119 = vsel %vm666, %v1118, %v1117
        %v1122 = vmul.f32 %v1103, %v1119
        %v1123 = vmul.f32 %v1104, %v1118
        %v1125 = vcombine.high %v1122, %v1122
        %v1127 = vpack.c.bf16 %v1122, %v1122
        %v1128 = vpack.c.bf16 %v1125, %v1125
        %v1129 = vpack.c.bf16 %v1123, %v1123
        %1133 = vrot.lane.b32.xlu0 %v1127, 113
        %v1134 = vpop.permute.xlu0 %1133
        %1135 = vrot.lane.b32.xlu0 %v1128, 113
        %v1136 = vpop.permute.xlu0 %1135
        %1137 = vrot.lane.b32.xlu0 %v1129, 113
        %v1138 = vpop.permute.xlu0 %1137
        %v1139 = vsel %vm687, %v1134, %v1136
        %v1140 = vsel %vm687, %v1136, %v1138
        %1143 = vst [vmem:[#allocation4 + $0x60] sm:$0x3] %v1139
        %1144 = vst [vmem:[#allocation4 + $0x68] sm:$0x3] %v1140
        %v1145 = vld [vmem:[#allocation2 + $0x4] sm:$0xff]
        %v1146 = vld [vmem:[#allocation2 + $0xc] sm:$0xf]
        %v1147 = vld [vmem:[%s696] ss:$8 sm:$0x3]
        %v1149 = vlaneseq
        %v1150 = vshrl.u32 %v1149, 7
        %v1151 = vsub.s32 0, %v1150
        %v1152 = vrot.slane %v1147, %v1151
        %v1153 = vlaneseq
        %v1154 = vshrl.u32 %v1153, 7
        %v1155 = vsub.s32 1, %v1154
        %v1156 = vrot.slane %v1147, %v1155
        %v1157 = vcombine.low %v1152, %v1156
        %1158 = vrot.lane.b32.xlu0 %v1157, 16
        %v1159 = vpop.permute.xlu0 %1158
        %v1160 = vrot.slane %v1159, 4
        %v1161 = vsel %vm711, %v1160, %v1159
        %v1164 = vmul.f32 %v1145, %v1161
        %v1165 = vmul.f32 %v1146, %v1160
        %v1167 = vcombine.high %v1164, %v1164
        %v1169 = vpack.c.bf16 %v1164, %v1164
        %v1170 = vpack.c.bf16 %v1167, %v1167
        %v1171 = vpack.c.bf16 %v1165, %v1165
        %1175 = vrot.lane.b32.xlu0 %v1169, 112
        %v1176 = vpop.permute.xlu0 %1175
        %1177 = vrot.lane.b32.xlu0 %v1170, 112
        %v1178 = vpop.permute.xlu0 %1177
        %1179 = vrot.lane.b32.xlu0 %v1171, 112
        %v1180 = vpop.permute.xlu0 %1179
        %v1181 = vsel %vm732, %v1176, %v1178
        %v1182 = vsel %vm732, %v1178, %v1180
        %1185 = vst [vmem:[#allocation4 + $0x70] sm:$0x3] %v1181
        %1186 = vst [vmem:[#allocation4 + $0x78] sm:$0x3] %v1182
        %v1187 = vld [vmem:[#allocation2 + $0x4] sm:$0xff]
        %v1188 = vld [vmem:[#allocation2 + $0xc] sm:$0xf]
        %v1189 = vld [vmem:[%s741] ss:$8 sm:$0x3]
        %v1191 = vlaneseq
        %v1192 = vshrl.u32 %v1191, 7
        %v1193 = vsub.s32 0, %v1192
        %v1194 = vrot.slane %v1189, %v1193
        %v1195 = vlaneseq
        %v1196 = vshrl.u32 %v1195, 7
        %v1197 = vsub.s32 1, %v1196
        %v1198 = vrot.slane %v1189, %v1197
        %v1199 = vcombine.low %v1194, %v1198
        %1200 = vrot.lane.b32.xlu0 %v1199, 17
        %v1201 = vpop.permute.xlu0 %1200
        %v1202 = vrot.slane %v1201, 4
        %v1203 = vsel %vm756, %v1202, %v1201
        %v1206 = vmul.f32 %v1187, %v1203
        %v1207 = vmul.f32 %v1188, %v1202
        %v1209 = vcombine.high %v1206, %v1206
        %v1211 = vpack.c.bf16 %v1206, %v1206
        %v1212 = vpack.c.bf16 %v1209, %v1209
        %v1213 = vpack.c.bf16 %v1207, %v1207
        %1217 = vrot.lane.b32.xlu0 %v1211, 111
        %v1218 = vpop.permute.xlu0 %1217
        %1219 = vrot.lane.b32.xlu0 %v1212, 111
        %v1220 = vpop.permute.xlu0 %1219
        %1221 = vrot.lane.b32.xlu0 %v1213, 111
        %v1222 = vpop.permute.xlu0 %1221
        %v1223 = vsel %vm777, %v1218, %v1220
        %v1224 = vsel %vm777, %v1220, %v1222
        %1227 = vst [vmem:[#allocation4 + $0x80] sm:$0x3] %v1223
        %1228 = vst [vmem:[#allocation4 + $0x88] sm:$0x3] %v1224
        %v1229 = vld [vmem:[#allocation4] sm:$0xff]
        %v1230 = vld [vmem:[#allocation4 + $0x8] sm:$0xff]
        %v1231 = vld [vmem:[#allocation4 + $0x10] sm:$0xff]
        %v1232 = vld [vmem:[#allocation4 + $0x18] sm:$0xff]
        %v1233 = vld [vmem:[#allocation4 + $0x20] sm:$0xff]
        %v1234 = vld [vmem:[#allocation4 + $0x28] sm:$0xff]
        %v1235 = vld [vmem:[#allocation4 + $0x30] sm:$0xff]
        %v1236 = vld [vmem:[#allocation4 + $0x38] sm:$0xff]
        %v1237 = vld [vmem:[#allocation4 + $0x40] sm:$0xff]
        %v1238 = vld [vmem:[#allocation4 + $0x48] sm:$0xff]
        %v1239 = vld [vmem:[#allocation4 + $0x50] sm:$0xff]
        %v1240 = vld [vmem:[#allocation4 + $0x58] sm:$0xff]
        %v1241 = vld [vmem:[#allocation4 + $0x60] sm:$0xff]
        %v1242 = vld [vmem:[#allocation4 + $0x68] sm:$0xff]
        %v1243 = vld [vmem:[#allocation4 + $0x70] sm:$0xff]
        %v1244 = vld [vmem:[#allocation4 + $0x78] sm:$0xff]
        %v1245 = vld [vmem:[#allocation4 + $0x80] sm:$0xff]
        %v1246 = vld [vmem:[#allocation4 + $0x88] sm:$0xff]
        %1248 = vset.pattern.permute.xlu0 0
        %1249 = vperm.xlu0 %1248, %v397
        %v1250 = vpop.permute.xlu0 %1249
        %v1253 = vunpack.c.l.b16 %v396
        %v1254 = vunpack.c.h.b16 %v396
        %v1255 = vpack.c.b16 %v1253, %v1253
        %v1256 = vpack.c.b16 %v1254, %v1254
        %v1259 = vsel %vm711, %v1256, 0
        %1261 = vmatprep.subr.bf16.mxu0 %v1230
        %1262 = vmatpush1.bf16.msra.mxu0 %v1229
        %1263 = vmatprep.subr.bf16.mxu0 %v1232
        %1264 = vmatpush1.bf16.msra.mxu0 %v1231
        %1265 = vmatprep.subr.bf16.mxu0 %v1234
        %1266 = vmatpush1.bf16.msra.mxu0 %v1233
        %1267 = vmatprep.subr.bf16.mxu0 %v1236
        %1268 = vmatpush1.bf16.msra.mxu0 %v1235
        %1269 = vmatprep.subr.bf16.mxu0 %v1238
        %1270 = vmatpush1.bf16.msra.mxu0 %v1237
        %1271 = vmatprep.subr.bf16.mxu0 %v1240
        %1272 = vmatpush1.bf16.msra.mxu0 %v1239
        %1273 = vmatprep.subr.bf16.mxu0 %v1242
        %1274 = vmatpush1.bf16.msra.mxu0 %v1241
        %1275 = vmatprep.subr.bf16.mxu0 %v1244
        %1276 = vmatpush1.bf16.msra.mxu0 %v1243
        %1277 = vmatprep.subr.bf16.mxu0 %v1246
        %1278 = vmatpush1.bf16.msra.mxu0 %v1245
        %1279 = vmatprep.subr.bf16.mxu0 0
        %1280 = vmatpush1.bf16.msra.mxu0 0
        %1281 = vmatprep.subr.bf16.mxu0 0
        %1282 = vmatpush1.bf16.msra.mxu0 0
        %1283 = vmatprep.subr.bf16.mxu0 0
        %1284 = vmatpush1.bf16.msra.mxu0 0
        %1285 = vmatprep.subr.bf16.mxu0 0
        %1286 = vmatpush1.bf16.msra.mxu0 0
        %1287 = vmatprep.subr.bf16.mxu0 0
        %1288 = vmatpush1.bf16.msra.mxu0 0
        %1289 = vmatprep.subr.bf16.mxu0 0
        %1290 = vmatpush1.bf16.msra.mxu0 0
        %1291 = vmatprep.subr.bf16.mxu0 0
        %1292 = vmatpush1.bf16.msra.mxu0 0
        %1293 = vmatprep.mubr.bf16.mxu0 %v1259
        %1294 = vmatmul.mubr.bf16.gmra.mrb[0].mxu0 %v1255
        %v1295 = vpop.f32.mrb[0].mxu0
        %v1296 = vadd.f32 %v1250, %v1295
        %v1297 = vpop.f32.mrb[0].mxu0
        %v1298 = vadd.f32 %v1250, %v1297
        %v1299 = vpop.f32.mrb[0].mxu0
        %v1300 = vpop.f32.mrb[0].mxu0
        %1301 = vdwg.mxu0
        %v1302 = vpack.c.bf16 %v1296, %v1296
        %v1303 = vpack.c.bf16 %v1298, %v1298
        %v1306 = vunpack.c.l.b16 %v1302
        %v1307 = vunpack.c.l.b16 %v1303
        %v1308 = vpack.c.b16 %v1307, %v1306
        %1310 = vst [vmem:[#allocation6] sm:$0xff] %v1308
        %v1313 = vunpack.c.l.s4 1983009808
        %v1314 = vunpack.c.0.s8 %v1313
        %v1315 = vlaneseq
        %v1316 = vshrl.u32 %v1315, 7
        %v1317 = vsub.s32 %v1314, %v1316
        %v1318 = vrot.slane %v400, %v1317
        %1320 = vst [vmem:[#allocation6 + $0x8] sm:$0x33] %v1318
        %v1321 = vld [vmem:[#allocation6] sm:$0xff]
        %v1322 = vld [vmem:[#allocation6 + $0x8] sm:$0x33]
        %v1323 = vld [vmem:[%s9] sm:$0xf]
        %v1324 = vld [vmem:[%s9 + $0x4] sm:$0xf]
        %v1325 = vld [vmem:[%s9 + $0x8] sm:$0xf]
        %v1326 = vld [vmem:[%s9 + $0xc] sm:$0xf]
        %v1327 = vld [vmem:[%s9 + $0x10] sm:$0xf]
        %v1328 = vld [vmem:[%s9 + $0x14] sm:$0xf]
        %v1329 = vld [vmem:[%s9 + $0x18] sm:$0xf]
        %v1330 = vld [vmem:[%s9 + $0x1c] sm:$0xf]
        %v1331 = vld [vmem:[%s9 + $0x20] sm:$0xf]
        %v1332 = vld [vmem:[%s9 + $0x24] sm:$0xf]
        %v1333 = vld [vmem:[%s9 + $0x28] sm:$0xf]
        %v1334 = vld [vmem:[%s9 + $0x2c] sm:$0xf]
        %v1335 = vld [vmem:[%s9 + $0x30] sm:$0xf]
        %v1336 = vld [vmem:[%s9 + $0x34] sm:$0xf]
        %v1337 = vld [vmem:[%s9 + $0x38] sm:$0xf]
        %v1338 = vld [vmem:[%s9 + $0x3c] sm:$0xf]
        %v1339 = vld [vmem:[%s9 + $0x40] sm:$0xf]
        %v1340 = vld [vmem:[%s9 + $0x44] sm:$0xf]
        %v1341 = vld [vmem:[%s9 + $0x48] sm:$0xf]
        %v1342 = vld [vmem:[%s9 + $0x4c] sm:$0xf]
        %v1343 = vld [vmem:[%s9 + $0x50] sm:$0xf]
        %v1344 = vld [vmem:[%s9 + $0x54] sm:$0xf]
        %v1345 = vld [vmem:[%s9 + $0x58] sm:$0xf]
        %v1346 = vld [vmem:[%s9 + $0x5c] sm:$0xf]
        %v1347 = vld [vmem:[%s9 + $0x60] sm:$0xf]
        %v1348 = vld [vmem:[%s9 + $0x64] sm:$0xf]
        %v1349 = vld [vmem:[%s9 + $0x68] sm:$0xf]
        %v1350 = vld [vmem:[%s9 + $0x6c] sm:$0xf]
        %v1351 = vld [vmem:[%s9 + $0x70] sm:$0xf]
        %v1352 = vld [vmem:[%s9 + $0x74] sm:$0xf]
        %v1353 = vld [vmem:[%s9 + $0x78] sm:$0xf]
        %v1354 = vld [vmem:[%s9 + $0x7c] sm:$0xf]
        %v1357 = vunpack.c.l.b16 %v1321
        %v1358 = vunpack.c.h.b16 %v1321
        %v1359 = vunpack.c.l.b16 %v1322
        %v1360 = vunpack.c.h.b16 %v1322
        %v1361 = vpack.c.b16 %v1359, %v1357
        %v1362 = vpack.c.b16 %v1360, %v1358
        %v1397 = vunpack.c.l.b16 %v1323
        %v1398 = vunpack.c.l.b16 %v1324
        %v1399 = vunpack.c.l.b16 %v1325
        %v1400 = vunpack.c.l.b16 %v1326
        %v1401 = vunpack.c.l.b16 %v1327
        %v1402 = vunpack.c.l.b16 %v1328
        %v1403 = vunpack.c.l.b16 %v1329
        %v1404 = vunpack.c.l.b16 %v1330
        %v1405 = vunpack.c.l.b16 %v1331
        %v1406 = vunpack.c.l.b16 %v1332
        %v1407 = vunpack.c.l.b16 %v1333
        %v1408 = vunpack.c.l.b16 %v1334
        %v1409 = vunpack.c.l.b16 %v1335
        %v1410 = vunpack.c.l.b16 %v1336
        %v1411 = vunpack.c.l.b16 %v1337
        %v1412 = vunpack.c.l.b16 %v1338
        %v1413 = vunpack.c.l.b16 %v1339
        %v1414 = vunpack.c.l.b16 %v1340
        %v1415 = vunpack.c.l.b16 %v1341
        %v1416 = vunpack.c.l.b16 %v1342
        %v1417 = vunpack.c.l.b16 %v1343
        %v1418 = vunpack.c.l.b16 %v1344
        %v1419 = vunpack.c.l.b16 %v1345
        %v1420 = vunpack.c.l.b16 %v1346
        %v1421 = vunpack.c.l.b16 %v1347
        %v1422 = vunpack.c.l.b16 %v1348
        %v1423 = vunpack.c.l.b16 %v1349
        %v1424 = vunpack.c.l.b16 %v1350
        %v1425 = vunpack.c.l.b16 %v1351
        %v1426 = vunpack.c.l.b16 %v1352
        %v1427 = vunpack.c.l.b16 %v1353
        %v1428 = vunpack.c.l.b16 %v1354
        %v1429 = vpack.c.b16 %v1398, %v1397
        %v1430 = vpack.c.b16 %v1400, %v1399
        %v1431 = vpack.c.b16 %v1402, %v1401
        %v1432 = vpack.c.b16 %v1404, %v1403
        %v1433 = vpack.c.b16 %v1406, %v1405
        %v1434 = vpack.c.b16 %v1408, %v1407
        %v1435 = vpack.c.b16 %v1410, %v1409
        %v1436 = vpack.c.b16 %v1412, %v1411
        %v1437 = vpack.c.b16 %v1414, %v1413
        %v1438 = vpack.c.b16 %v1416, %v1415
        %v1439 = vpack.c.b16 %v1418, %v1417
        %v1440 = vpack.c.b16 %v1420, %v1419
        %v1441 = vpack.c.b16 %v1422, %v1421
        %v1442 = vpack.c.b16 %v1424, %v1423
        %v1443 = vpack.c.b16 %v1426, %v1425
        %v1444 = vpack.c.b16 %v1428, %v1427
        %1461 = vmatprep.subr.bf16.mxu0 0
        %1462 = vmatpush1.bf16.msra.mxu0 %v1429
        %1463 = vmatprep.subr.bf16.mxu0 0
        %1464 = vmatpush1.bf16.msra.mxu0 %v1430
        %1465 = vmatprep.subr.bf16.mxu0 0
        %1466 = vmatpush1.bf16.msra.mxu0 %v1431
        %1467 = vmatprep.subr.bf16.mxu0 0
        %1468 = vmatpush1.bf16.msra.mxu0 %v1432
        %1469 = vmatprep.subr.bf16.mxu0 0
        %1470 = vmatpush1.bf16.msra.mxu0 %v1433
        %1471 = vmatprep.subr.bf16.mxu0 0
        %1472 = vmatpush1.bf16.msra.mxu0 %v1434
        %1473 = vmatprep.subr.bf16.mxu0 0
        %1474 = vmatpush1.bf16.msra.mxu0 %v1435
        %1475 = vmatprep.subr.bf16.mxu0 0
        %1476 = vmatpush1.bf16.msra.mxu0 %v1436
        %1477 = vmatprep.subr.bf16.mxu0 0
        %1478 = vmatpush1.bf16.msra.mxu0 %v1437
        %1479 = vmatprep.subr.bf16.mxu0 0
        %1480 = vmatpush1.bf16.msra.mxu0 %v1438
        %1481 = vmatprep.subr.bf16.mxu0 0
        %1482 = vmatpush1.bf16.msra.mxu0 %v1439
        %1483 = vmatprep.subr.bf16.mxu0 0
        %1484 = vmatpush1.bf16.msra.mxu0 %v1440
        %1485 = vmatprep.subr.bf16.mxu0 0
        %1486 = vmatpush1.bf16.msra.mxu0 %v1441
        %1487 = vmatprep.subr.bf16.mxu0 0
        %1488 = vmatpush1.bf16.msra.mxu0 %v1442
        %1489 = vmatprep.subr.bf16.mxu0 0
        %1490 = vmatpush1.bf16.msra.mxu0 %v1443
        %1491 = vmatprep.subr.bf16.mxu0 0
        %1492 = vmatpush1.bf16.msra.mxu0 %v1444
        %1493 = vmatprep.mubr.bf16.mxu0 %v1362
        %1494 = vmatmul.mubr.bf16.gmra.mrb[0].mxu0 %v1361
        %v1495 = vpop.f32.mrb[0].mxu0
        %v1496 = vadd.f32 0.0, %v1495
        %v1497 = vpop.f32.mrb[0].mxu0
        %v1498 = vpop.f32.mrb[0].mxu0
        %v1499 = vadd.f32 0.0, %v1498
        %v1500 = vpop.f32.mrb[0].mxu0
        %1501 = vdwg.mxu0
        %vm1502 = vcmp.gt.f32.partialorder %v1496, 0.0
        %v1503 = vmul.f32 %v1496, 0.2
        %v1504 = vsel %vm1502, %v1496, %v1503
        %vm1505 = vcmask 519168
        %1506 = vst.msk [vmem:[#allocation3 + $0x4] sm:$0xf] %vm1505, %v1499
        %v1507 = vld [vmem:[#allocation3] sm:$0xff]
        %v1508 = vld [vmem:[%s8] sm:$0x1]
        %v1509 = vlaneseq
        %v1510 = vshrl.u32 %v1509, 7
        %v1511 = vsub.s32 0, %v1510
        %v1512 = vrot.slane %v1508, %v1511
        %1514 = vrot.lane.b32.xlu0 %v1512, 119
        %v1515 = vpop.permute.xlu0 %1514
        %v1516 = vrot.slane %v1515, 4
        %vm1517 = vcmask 973824
        %v1518 = vsel %vm1517, %v1516, %v1515
        %v1520 = vmul.f32 %v1507, %v1518
        %v1522 = vcombine.high %v1520, %v1520
        %v1524 = vpack.c.bf16 %v1520, %v1520
        %v1525 = vpack.c.bf16 %v1522, %v1522
        %1528 = vrot.lane.b32.xlu0 %v1524, 9
        %v1529 = vpop.permute.xlu0 %1528
        %1530 = vrot.lane.b32.xlu0 %v1525, 9
        %v1531 = vpop.permute.xlu0 %1530
        %vm1532 = vcmask 72704
        %v1533 = vsel %vm1532, %v1529, %v1531
        %vm1535 = vcmask 517120
        %1536 = vst.msk [vmem:[#allocation5] sm:$0x3] %vm1535, %v1533
        %v1537 = vld [vmem:[#allocation3] sm:$0xff]
        %v1538 = vld [vmem:[%s8 + $0x1] sm:$0x1]
        %v1539 = vlaneseq
        %v1540 = vshrl.u32 %v1539, 7
        %v1541 = vsub.s32 0, %v1540
        %v1542 = vrot.slane %v1538, %v1541
        %1544 = vrot.lane.b32.xlu0 %v1542, 120
        %v1545 = vpop.permute.xlu0 %1544
        %v1546 = vrot.slane %v1545, 4
        %vm1547 = vcmask 982016
        %v1548 = vsel %vm1547, %v1546, %v1545
        %v1550 = vmul.f32 %v1537, %v1548
        %v1552 = vcombine.high %v1550, %v1550
        %v1554 = vpack.c.bf16 %v1550, %v1550
        %v1555 = vpack.c.bf16 %v1552, %v1552
        %1558 = vrot.lane.b32.xlu0 %v1554, 8
        %v1559 = vpop.permute.xlu0 %1558
        %1560 = vrot.lane.b32.xlu0 %v1555, 8
        %v1561 = vpop.permute.xlu0 %1560
        %vm1562 = vcmask 64512
        %v1563 = vsel %vm1562, %v1559, %v1561
        %1565 = vst.msk [vmem:[#allocation5 + $0x8] sm:$0x3] %vm1535, %v1563
        %v1566 = vld [vmem:[#allocation3] sm:$0xff]
        %v1567 = vld [vmem:[%s8 + $0x2] sm:$0x1]
        %v1568 = vlaneseq
        %v1569 = vshrl.u32 %v1568, 7
        %v1570 = vsub.s32 0, %v1569
        %v1571 = vrot.slane %v1567, %v1570
        %1573 = vrot.lane.b32.xlu0 %v1571, 121
        %v1574 = vpop.permute.xlu0 %1573
        %v1575 = vrot.slane %v1574, 4
        %vm1576 = vcmask 990208
        %v1577 = vsel %vm1576, %v1575, %v1574
        %v1579 = vmul.f32 %v1566, %v1577
        %v1581 = vcombine.high %v1579, %v1579
        %v1583 = vpack.c.bf16 %v1579, %v1579
        %v1584 = vpack.c.bf16 %v1581, %v1581
        %1587 = vrot.lane.b32.xlu0 %v1583, 7
        %v1588 = vpop.permute.xlu0 %1587
        %1589 = vrot.lane.b32.xlu0 %v1584, 7
        %v1590 = vpop.permute.xlu0 %1589
        %vm1591 = vcmask 56320
        %v1592 = vsel %vm1591, %v1588, %v1590
        %1594 = vst.msk [vmem:[#allocation5 + $0x10] sm:$0x3] %vm1535, %v1592
        %v1595 = vld [vmem:[#allocation3] sm:$0xff]
        %v1596 = vld [vmem:[%s8 + $0x3] sm:$0x1]
        %v1597 = vlaneseq
        %v1598 = vshrl.u32 %v1597, 7
        %v1599 = vsub.s32 0, %v1598
        %v1600 = vrot.slane %v1596, %v1599
        %1602 = vrot.lane.b32.xlu0 %v1600, 127
        %v1603 = vpop.permute.xlu0 %1602
        %v1604 = vrot.slane %v1603, 4
        %v1605 = vsel %vm554, %v1604, %v1603
        %v1607 = vmul.f32 %v1595, %v1605
        %v1609 = vcombine.high %v1607, %v1607
        %v1611 = vpack.c.bf16 %v1607, %v1607
        %v1612 = vpack.c.bf16 %v1609, %v1609
        %1615 = vrot.lane.b32.xlu0 %v1611, 1
        %v1616 = vpop.permute.xlu0 %1615
        %1617 = vrot.lane.b32.xlu0 %v1612, 1
        %v1618 = vpop.permute.xlu0 %1617
        %v1619 = vsel %vm575, %v1616, %v1618
        %1621 = vst.msk [vmem:[#allocation5 + $0x18] sm:$0x3] %vm1535, %v1619
        %v1622 = vld [vmem:[#allocation3 + $0x4] sm:$0xf]
        %v1623 = vld [vmem:[%s8 + $0x4] sm:$0x1]
        %v1624 = vlaneseq
        %v1625 = vshrl.u32 %v1624, 7
        %v1626 = vsub.s32 0, %v1625
        %v1627 = vrot.slane %v1623, %v1626
        %v1628 = vmul.f32 %v1622, %v1627
        %v1629 = vpack.c.bf16 %v1628, %v1628
        %1630 = vst.msk [vmem:[#allocation5 + $0x20] sm:$0x3] %vm1535, %v1629
        %v1631 = vld [vmem:[#allocation3 + $0x4] sm:$0xf]
        %v1632 = vld [vmem:[%s8 + $0x5] sm:$0x1]
        %v1633 = vlaneseq
        %v1634 = vshrl.u32 %v1633, 7
        %v1635 = vsub.s32 0, %v1634
        %v1636 = vrot.slane %v1632, %v1635
        %1638 = vrot.lane.b32.xlu0 %v1636, 1
        %v1639 = vpop.permute.xlu0 %1638
        %v1641 = vmul.f32 %v1631, %v1639
        %v1642 = vpack.c.bf16 %v1641, %v1641
        %1644 = vrot.lane.b32.xlu0 %v1642, 127
        %v1645 = vpop.permute.xlu0 %1644
        %1647 = vst.msk [vmem:[#allocation5 + $0x28] sm:$0x3] %vm1535, %v1645
        %v1648 = vld [vmem:[#allocation3 + $0x4] sm:$0xf]
        %v1649 = vld [vmem:[%s8 + $0x6] sm:$0x1]
        %v1650 = vlaneseq
        %v1651 = vshrl.u32 %v1650, 7
        %v1652 = vsub.s32 0, %v1651
        %v1653 = vrot.slane %v1649, %v1652
        %1655 = vrot.lane.b32.xlu0 %v1653, 7
        %v1656 = vpop.permute.xlu0 %1655
        %v1658 = vmul.f32 %v1648, %v1656
        %v1659 = vpack.c.bf16 %v1658, %v1658
        %1661 = vrot.lane.b32.xlu0 %v1659, 121
        %v1662 = vpop.permute.xlu0 %1661
        %1664 = vst.msk [vmem:[#allocation5 + $0x30] sm:$0x3] %vm1535, %v1662
        %v1665 = vld [vmem:[#allocation3 + $0x4] sm:$0xf]
        %v1666 = vld [vmem:[%s8 + $0x7] sm:$0x1]
        %v1667 = vlaneseq
        %v1668 = vshrl.u32 %v1667, 7
        %v1669 = vsub.s32 0, %v1668
        %v1670 = vrot.slane %v1666, %v1669
        %1672 = vrot.lane.b32.xlu0 %v1670, 8
        %v1673 = vpop.permute.xlu0 %1672
        %v1675 = vmul.f32 %v1665, %v1673
        %v1676 = vpack.c.bf16 %v1675, %v1675
        %1678 = vrot.lane.b32.xlu0 %v1676, 120
        %v1679 = vpop.permute.xlu0 %1678
        %1681 = vst.msk [vmem:[#allocation5 + $0x38] sm:$0x3] %vm1535, %v1679
        %v1682 = vld [vmem:[#allocation3 + $0x4] sm:$0xf]
        %v1683 = vld [vmem:[%s8 + $0x8] sm:$0x1]
        %v1684 = vlaneseq
        %v1685 = vshrl.u32 %v1684, 7
        %v1686 = vsub.s32 0, %v1685
        %v1687 = vrot.slane %v1683, %v1686
        %1689 = vrot.lane.b32.xlu0 %v1687, 9
        %v1690 = vpop.permute.xlu0 %1689
        %v1692 = vmul.f32 %v1682, %v1690
        %v1693 = vpack.c.bf16 %v1692, %v1692
        %1695 = vrot.lane.b32.xlu0 %v1693, 119
        %v1696 = vpop.permute.xlu0 %1695
        %1698 = vst.msk [vmem:[#allocation5 + $0x40] sm:$0x3] %vm1535, %v1696
        %v1699 = vld [vmem:[#allocation5] sm:$0xff]
        %v1700 = vld [vmem:[#allocation5 + $0x8] sm:$0xff]
        %v1701 = vld [vmem:[#allocation5 + $0x10] sm:$0xff]
        %v1702 = vld [vmem:[#allocation5 + $0x18] sm:$0xff]
        %v1703 = vld [vmem:[#allocation5 + $0x20] sm:$0xff]
        %v1704 = vld [vmem:[#allocation5 + $0x28] sm:$0xff]
        %v1705 = vld [vmem:[#allocation5 + $0x30] sm:$0xff]
        %v1706 = vld [vmem:[#allocation5 + $0x38] sm:$0xff]
        %v1707 = vld [vmem:[#allocation5 + $0x40] sm:$0xff]
        %1709 = vset.pattern.permute.xlu0 0
        %1710 = vperm.xlu0 %1709, %v399
        %v1711 = vpop.permute.xlu0 %1710
        %v1714 = vunpack.c.l.b16 %v398
        %v1715 = vunpack.c.h.b16 %v398
        %v1716 = vpack.c.b16 %v1714, %v1714
        %v1717 = vpack.c.b16 %v1715, %v1715
        %v1720 = vsel %vm711, %v1717, 0
        %1722 = vmatprep.subr.bf16.mxu0 0
        %1723 = vmatpush1.bf16.msra.mxu0 %v1699
        %1724 = vmatprep.subr.bf16.mxu0 0
        %1725 = vmatpush1.bf16.msra.mxu0 %v1700
        %1726 = vmatprep.subr.bf16.mxu0 0
        %1727 = vmatpush1.bf16.msra.mxu0 %v1701
        %1728 = vmatprep.subr.bf16.mxu0 0
        %1729 = vmatpush1.bf16.msra.mxu0 %v1702
        %1730 = vmatprep.subr.bf16.mxu0 0
        %1731 = vmatpush1.bf16.msra.mxu0 %v1703
        %1732 = vmatprep.subr.bf16.mxu0 0
        %1733 = vmatpush1.bf16.msra.mxu0 %v1704
        %1734 = vmatprep.subr.bf16.mxu0 0
        %1735 = vmatpush1.bf16.msra.mxu0 %v1705
        %1736 = vmatprep.subr.bf16.mxu0 0
        %1737 = vmatpush1.bf16.msra.mxu0 %v1706
        %1738 = vmatprep.subr.bf16.mxu0 0
        %1739 = vmatpush1.bf16.msra.mxu0 %v1707
        %1740 = vmatprep.subr.bf16.mxu0 0
        %1741 = vmatpush1.bf16.msra.mxu0 0
        %1742 = vmatprep.subr.bf16.mxu0 0
        %1743 = vmatpush1.bf16.msra.mxu0 0
        %1744 = vmatprep.subr.bf16.mxu0 0
        %1745 = vmatpush1.bf16.msra.mxu0 0
        %1746 = vmatprep.subr.bf16.mxu0 0
        %1747 = vmatpush1.bf16.msra.mxu0 0
        %1748 = vmatprep.subr.bf16.mxu0 0
        %1749 = vmatpush1.bf16.msra.mxu0 0
        %1750 = vmatprep.subr.bf16.mxu0 0
        %1751 = vmatpush1.bf16.msra.mxu0 0
        %1752 = vmatprep.subr.bf16.mxu0 0
        %1753 = vmatpush1.bf16.msra.mxu0 0
        %1754 = vmatprep.mubr.bf16.mxu0 %v1720
        %1755 = vmatmul.mubr.bf16.gmra.mrb[0].mxu0 %v1716
        %v1756 = vpop.f32.mrb[0].mxu0
        %v1757 = vadd.f32 %v1711, %v1756
        %v1758 = vpop.f32.mrb[0].mxu0
        %v1759 = vpop.f32.mrb[0].mxu0
        %v1760 = vpop.f32.mrb[0].mxu0
        %1761 = vdwg.mxu0
        %v1762 = vadd.f32 %v1504, %v1757
        %vm1763 = vcmask 523264
        %1764 = vst.msk [vmem:[%s352] sm:$0xff] %vm1763, %v1762
        %s1765 = sand.u32 %s247, 1
        %s1766 = scalar_lea.sflag [#allocation8], %s1765
        %s1767 = sand.u32 %s247, 1
        %s1768 = smul.addr %s1767, 8
        %s1769 = scalar_lea.vmem [#allocation7], %s1768
        // Predicated region
        $region61: #{tpu_custom_call.1} parent=59 // pred_check
          %p1770 = pneg %p257
        $region62: #{tpu_custom_call.1} parent=59 // pred_check_branch
          %1772 = sbr.rel (%p1770) target = $region64
        $region63: #{tpu_custom_call.1} parent=59 // pred_region
          %s1774 = ssub.s32 128, 128
          %1775 = vsyncadd %s1766, %s1774
          %s1776 = smul.addr %s24, 128
          %s1777 = scalar_lea.hbm %s10, %s1776
          %s1779 = sshll.u32 %s1769, 4
          %s1780 = int_to_ptr.vmem [resolvable:$true] %s1779
          %1782 = dma.vmem_to_hbm [thread:$0]  %s1780, 128, %s1777, %s1766
        $region64: #{tpu_custom_call.1} parent=59 // pred_fallthru
          _
      $region60: #{tpu_custom_call.1} parent=5 // pred_fallthru
        _
      %p1783 = scmp.le.s32.totalorder 2, %s19
      // Predicated region
      $region65: #{tpu_custom_call.1} parent=5 // pred_check
        %p1784 = pneg %p1783
      $region66: #{tpu_custom_call.1} parent=5 // pred_check_branch
        %1786 = sbr.rel (%p1784) target = $region68
      $region67: #{tpu_custom_call.1} parent=5 // pred_region
        %s1787 = ssub.s32 %s19, 2
        // Predicated region
        $region69: #{tpu_custom_call.1} parent=67 // pred_check
          %p1788 = pneg %p263
        $region70: #{tpu_custom_call.1} parent=67 // pred_check_branch
          %1790 = sbr.rel (%p1788) target = $region72
        $region71: #{tpu_custom_call.1} parent=67 // pred_region
          %s1791 = sand.u32 %s248, 1
          %s1792 = scalar_lea.sflag [#allocation8], %s1791
          %s1793 = sand.u32 %s248, 1
          %s1794 = smul.addr %s1793, 8
          %s1795 = scalar_lea.vmem [#allocation7], %s1794
          %1796 = dma.done %s1792, 128
        $region72: #{tpu_custom_call.1} parent=67 // pred_fallthru
          _
      $region68: #{tpu_custom_call.1} parent=5 // pred_fallthru
        _
    $region6: #{tpu_custom_call.1} parent=1 // loop_footer
      %s23 = sadd.s32 1, %s19
    $region7: #{tpu_custom_call.1} parent=1 // loop_footer_branch
      %18 = sbr.rel target = $region3
    $region8: #{tpu_custom_call.1} parent=1 // loop_exit
      _
    %1797 = vsyncpa [#allocation8], 1
    %s1798 = scalar_lea.sflag [#allocation8], 1
    %1799 = vsyncpa %s1798, 1

</llo_original>
